<compile_context>
chip_gen: v5e
topology: v5e:2x2
jax: 0.10.0
libtpu: 0.0.40
codegen_flags: <defaults>
</compile_context>

<pallas_src>
import functools

import jax
import jax.numpy as jnp
from jax.experimental import pallas as pl
from jax.experimental.pallas import tpu as pltpu

_LANE = 128     # TPU lane width (last-dim tile)
_SUBLANE = 8    # TPU sublane tile


def _round_up(a: int, m: int) -> int:
    return pl.cdiv(a, m) * m


def _policy_net_kernel(x_ref, w1_ref, b1_ref, w2_ref, b2_ref, o_ref, *,
                       pack: int, a_slot: int):
    # fc1 + ReLU (K = state_dim is tiny; MXU pads internally, compute negligible)
    h = jnp.dot(x_ref[...], w1_ref[...], preferred_element_type=jnp.float32)
    h = jnp.maximum(h + b1_ref[...], 0.0)                 # (tb, Hpad) + (1, Hpad)

    # fc2 into the lane-padded logit space (padded cols: w = 0, bias = sentinel)
    logits = jnp.dot(h, w2_ref[...], preferred_element_type=jnp.float32)
    logits = logits + b2_ref[...]                         # (tb, L) + (1, L)

    # Numerically stable softmax; padded lanes (sentinel logits) exp to exactly 0.
    m = jnp.max(logits, axis=-1, keepdims=True)
    e = jnp.exp(logits - m)
    probs = e / jnp.sum(e, axis=-1, keepdims=True)        # exact normalization

    # Pack `pack` batch rows per 128-lane output row (group-major):
    #   packed[p, q*a_slot + a] = probs[q*g + p, a],  g = tb // pack.
    # Static contiguous row-slices + static lane rolls; the zero padded lanes
    # of `probs` guarantee the rolled contributions never collide.
    g = o_ref.shape[0]
    acc = probs[0:g, :]
    for q in range(1, pack):
        acc = acc + pltpu.roll(probs[q * g:(q + 1) * g, :], shift=q * a_slot, axis=1)
    o_ref[...] = acc.astype(o_ref.dtype)


def policy_net_forward(x, w1, b1, w2, b2, *, block_batch: int = 1024):
    """x: (B, state_dim); w1: (state_dim, hidden); b1: (hidden,) or (1, hidden);
    w2: (hidden, action); b2: (action,) or (1, action)  ->  probs (B, action).

    block_batch: batch-tile sweep knob (1024-2048 good on v5e/v6e; bias toward
    2048-4096 on v7x where HBM BW makes per-step overhead relatively costlier).
    """
    B, state_dim = x.shape
    hidden_dim = w1.shape[1]
    action_dim = w2.shape[1]

    # --- Output packing geometry -------------------------------------------
    if action_dim >= _LANE:
        a_slot = _round_up(action_dim, _LANE)   # degenerate: no packing
        pack = 1
    else:
        a_slot = pl.next_power_of_2(action_dim)  # slot width per batch row
        pack = _LANE // a_slot                   # batch rows packed per 128 lanes
    out_lanes = a_slot * pack                    # 128 when pack > 1

    # --- Pad hidden dim to lane width; pad fc2 out-features with sentinel ---
    h_pad = _round_up(hidden_dim, _LANE)
    neg = jnp.finfo(jnp.float32).min / 2         # dtype-aware "minus infinity"
    w1_p = jnp.zeros((state_dim, h_pad), jnp.float32).at[:, :hidden_dim].set(w1)
    b1_p = jnp.zeros((1, h_pad), jnp.float32).at[:, :hidden_dim].set(
        jnp.reshape(b1, (1, hidden_dim)))
    w2_p = jnp.zeros((h_pad, out_lanes), jnp.float32).at[:hidden_dim, :action_dim].set(w2)
    b2_p = jnp.full((1, out_lanes), neg, jnp.float32).at[:, :action_dim].set(
        jnp.reshape(b2, (1, action_dim)))

    # --- Batch tiling: multiple of 8*pack sublane-quantum; aim for >=2 grid
    #     steps so the "parallel" axis shards across v7x's 2 TensorCores ------
    quantum = _SUBLANE * pack
    tb_target = max(1, min(block_batch, pl.cdiv(B, 2)))
    tb = _round_up(tb_target, quantum)
    b_pad = _round_up(B, tb)
    x_p = x if b_pad == B else jnp.pad(x, ((0, b_pad - B), (0, 0)))
    nblk = b_pad // tb
    g = tb // pack                               # packed output rows per tile

    kernel = functools.partial(_policy_net_kernel, pack=pack, a_slot=a_slot)
    out = pl.pallas_call(
        kernel,
        out_shape=jax.ShapeDtypeStruct((b_pad // pack, out_lanes), jnp.float32),
        grid_spec=pltpu.PrefetchScalarGridSpec(
            num_scalar_prefetch=0,
            grid=(nblk,),
            in_specs=[
                pl.BlockSpec((tb, state_dim), lambda i: (i, 0)),       # x: batch-tiled
                pl.BlockSpec((state_dim, h_pad), lambda i: (0, 0)),    # w1: resident
                pl.BlockSpec((1, h_pad), lambda i: (0, 0)),            # b1: resident
                pl.BlockSpec((h_pad, out_lanes), lambda i: (0, 0)),    # w2: resident
                pl.BlockSpec((1, out_lanes), lambda i: (0, 0)),        # b2: resident
            ],
            out_specs=pl.BlockSpec((g, out_lanes), lambda i: (i, 0)),  # packed probs
        ),
        compiler_params=pltpu.CompilerParams(
            dimension_semantics=("parallel",),   # shards batch across v7x's 2 TCs
        ),
    )(x_p, w1_p, b1_p, w2_p, b2_p)

    # Unpack the packed slab (tiny: b_pad * a_slot floats). A downstream
    # consumer could consume `out` directly and fuse this reshape/slice.
    probs = (out.reshape(nblk, g, pack, a_slot)
                .transpose(0, 2, 1, 3)
                .reshape(b_pad, a_slot))
    return probs[:B, :action_dim]


def reference_forward(x, w1, b1, w2, b2):
    h = jax.nn.relu(x @ w1 + jnp.reshape(b1, (1, -1)))
    logits = h @ w2 + jnp.reshape(b2, (1, -1))
    return jax.nn.softmax(logits, axis=-1)


if __name__ == "__main__":
    # Small shapes consistent with PolicyNet(state_dim, hidden_dim, action_dim).
    # batch=300 exercises batch padding AND a 2-step grid (both TCs on v7x).
    batch, state_dim, hidden_dim, action_dim = 300, 4, 64, 4

    key = jax.random.PRNGKey(0)
    k_x, k_w1, k_b1, k_w2, k_b2 = jax.random.split(key, 5)

    # Deterministic init mimicking torch.nn.Linear: U(-1/sqrt(fan_in), 1/sqrt(fan_in)).
    lim1 = 1.0 / (state_dim ** 0.5)
    lim2 = 1.0 / (hidden_dim ** 0.5)
    x = jax.random.normal(k_x, (batch, state_dim), dtype=jnp.float32)
    w1 = jax.random.uniform(k_w1, (state_dim, hidden_dim), jnp.float32, -lim1, lim1)
    b1 = jax.random.uniform(k_b1, (hidden_dim,), jnp.float32, -lim1, lim1)
    w2 = jax.random.uniform(k_w2, (hidden_dim, action_dim), jnp.float32, -lim2, lim2)
    b2 = jax.random.uniform(k_b2, (action_dim,), jnp.float32, -lim2, lim2)

    out = policy_net_forward(x, w1, b1, w2, b2)
    out = jax.block_until_ready(out)

    ref = reference_forward(x, w1, b1, w2, b2)
    assert out.shape == (batch, action_dim)
    assert jnp.allclose(out, ref, atol=1e-5, rtol=1e-5), "mismatch vs reference"
    assert jnp.allclose(jnp.sum(out, axis=-1), 1.0, atol=1e-5), "softmax rows must sum to 1"

    print("KERNEL_OK")
</pallas_src>

<mosaic_0001>
module attributes {stable_mosaic.version = 11 : i64} {
  func.func @_policy_net_kernel(%arg0: i32, %arg1: memref<256x4xf32, #tpu.memory_space<vmem>>, %arg2: memref<4x128xf32, #tpu.memory_space<vmem>>, %arg3: memref<1x128xf32, #tpu.memory_space<vmem>>, %arg4: memref<128x128xf32, #tpu.memory_space<vmem>>, %arg5: memref<1x128xf32, #tpu.memory_space<vmem>>, %arg6: memref<8x128xf32, #tpu.memory_space<vmem>>) attributes {dimension_semantics = [#tpu.dimension_semantics<parallel>], iteration_bounds = array<i64: 2>, scalar_prefetch = 0 : i64, scratch_operands = 0 : i64, tpu.core_type = #tpu.core_type<tc>, window_params = [{transform_indices = @transform_0, window_bounds = array<i64: 256, 4>}, {pipeline_mode = #tpu.pipeline_mode<synchronous>, transform_indices = @transform_1, window_bounds = array<i64: 4, 128>}, {pipeline_mode = #tpu.pipeline_mode<synchronous>, transform_indices = @transform_2, window_bounds = array<i64: 1, 128>}, {pipeline_mode = #tpu.pipeline_mode<synchronous>, transform_indices = @transform_3, window_bounds = array<i64: 128, 128>}, {pipeline_mode = #tpu.pipeline_mode<synchronous>, transform_indices = @transform_4, window_bounds = array<i64: 1, 128>}, {transform_indices = @transform_5, window_bounds = array<i64: 8, 128>}]} {
    %c0 = arith.constant 0 : index
    %c0_0 = arith.constant 0 : index
    %0 = vector.load %arg1[%c0, %c0_0] : memref<256x4xf32, #tpu.memory_space<vmem>>, vector<256x4xf32>
    %c0_1 = arith.constant 0 : index
    %c0_2 = arith.constant 0 : index
    %1 = vector.load %arg2[%c0_1, %c0_2] : memref<4x128xf32, #tpu.memory_space<vmem>>, vector<4x128xf32>
    %cst = arith.constant dense<0.000000e+00> : vector<256x128xf32>
    %2 = tpu.matmul %0, %1, %cst {dimension_numbers = #tpu.dot_dimension_numbers<[1], [0], [0], [1], [0, 0, 1, 1], [], []>} : vector<256x4xf32>, vector<4x128xf32>, vector<256x128xf32> -> vector<256x128xf32>
    %c0_3 = arith.constant 0 : index
    %c0_4 = arith.constant 0 : index
    %3 = vector.load %arg3[%c0_3, %c0_4] : memref<1x128xf32, #tpu.memory_space<vmem>>, vector<1x128xf32>
    %4 = vector.broadcast %3 : vector<1x128xf32> to vector<256x128xf32>
    %5 = arith.addf %2, %4 : vector<256x128xf32>
    %cst_5 = arith.constant 0.000000e+00 : f32
    %6 = vector.broadcast %cst_5 : f32 to vector<256x128xf32>
    %7 = arith.maximumf %5, %6 : vector<256x128xf32>
    %c0_6 = arith.constant 0 : index
    %c0_7 = arith.constant 0 : index
    %8 = vector.load %arg4[%c0_6, %c0_7] : memref<128x128xf32, #tpu.memory_space<vmem>>, vector<128x128xf32>
    %cst_8 = arith.constant dense<0.000000e+00> : vector<256x128xf32>
    %9 = tpu.matmul %7, %8, %cst_8 {dimension_numbers = #tpu.dot_dimension_numbers<[1], [0], [0], [1], [0, 0, 1, 1], [], []>} : vector<256x128xf32>, vector<128x128xf32>, vector<256x128xf32> -> vector<256x128xf32>
    %c0_9 = arith.constant 0 : index
    %c0_10 = arith.constant 0 : index
    %10 = vector.load %arg5[%c0_9, %c0_10] : memref<1x128xf32, #tpu.memory_space<vmem>>, vector<1x128xf32>
    %11 = vector.broadcast %10 : vector<1x128xf32> to vector<256x128xf32>
    %12 = arith.addf %9, %11 : vector<256x128xf32>
    %cst_11 = arith.constant dense<0xFF800000> : vector<256xf32>
    %13 = vector.multi_reduction <maximumf>, %12, %cst_11 [1] : vector<256x128xf32> to vector<256xf32>
    %14 = vector.shape_cast %13 : vector<256xf32> to vector<256x1xf32>
    %15 = vector.broadcast %14 : vector<256x1xf32> to vector<256x128xf32>
    %16 = arith.subf %12, %15 : vector<256x128xf32>
    %17 = math.exp %16 : vector<256x128xf32>
    %cst_12 = arith.constant dense<0.000000e+00> : vector<256xf32>
    %18 = vector.multi_reduction <add>, %17, %cst_12 [1] : vector<256x128xf32> to vector<256xf32>
    %19 = vector.shape_cast %18 : vector<256xf32> to vector<256x1xf32>
    %20 = vector.broadcast %19 : vector<256x1xf32> to vector<256x128xf32>
    %21 = arith.divf %17, %20 : vector<256x128xf32>
    %22 = vector.extract_strided_slice %21 {offsets = [0, 0], sizes = [8, 128], strides = [1, 1]} : vector<256x128xf32> to vector<8x128xf32>
    %23 = vector.extract_strided_slice %21 {offsets = [8, 0], sizes = [8, 128], strides = [1, 1]} : vector<256x128xf32> to vector<8x128xf32>
    %c4_i32 = arith.constant 4 : i32
    %24 = tpu.dynamic_rotate %23 by %c4_i32 dim 1 : vector<8x128xf32>, i32 -> vector<8x128xf32>
    %25 = arith.addf %22, %24 : vector<8x128xf32>
    %26 = vector.extract_strided_slice %21 {offsets = [16, 0], sizes = [8, 128], strides = [1, 1]} : vector<256x128xf32> to vector<8x128xf32>
    %c8_i32 = arith.constant 8 : i32
    %27 = tpu.dynamic_rotate %26 by %c8_i32 dim 1 : vector<8x128xf32>, i32 -> vector<8x128xf32>
    %28 = arith.addf %25, %27 : vector<8x128xf32>
    %29 = vector.extract_strided_slice %21 {offsets = [24, 0], sizes = [8, 128], strides = [1, 1]} : vector<256x128xf32> to vector<8x128xf32>
    %c12_i32 = arith.constant 12 : i32
    %30 = tpu.dynamic_rotate %29 by %c12_i32 dim 1 : vector<8x128xf32>, i32 -> vector<8x128xf32>
    %31 = arith.addf %28, %30 : vector<8x128xf32>
    %32 = vector.extract_strided_slice %21 {offsets = [32, 0], sizes = [8, 128], strides = [1, 1]} : vector<256x128xf32> to vector<8x128xf32>
    %c16_i32 = arith.constant 16 : i32
    %33 = tpu.dynamic_rotate %32 by %c16_i32 dim 1 : vector<8x128xf32>, i32 -> vector<8x128xf32>
    %34 = arith.addf %31, %33 : vector<8x128xf32>
    %35 = vector.extract_strided_slice %21 {offsets = [40, 0], sizes = [8, 128], strides = [1, 1]} : vector<256x128xf32> to vector<8x128xf32>
    %c20_i32 = arith.constant 20 : i32
    %36 = tpu.dynamic_rotate %35 by %c20_i32 dim 1 : vector<8x128xf32>, i32 -> vector<8x128xf32>
    %37 = arith.addf %34, %36 : vector<8x128xf32>
    %38 = vector.extract_strided_slice %21 {offsets = [48, 0], sizes = [8, 128], strides = [1, 1]} : vector<256x128xf32> to vector<8x128xf32>
    %c24_i32 = arith.constant 24 : i32
    %39 = tpu.dynamic_rotate %38 by %c24_i32 dim 1 : vector<8x128xf32>, i32 -> vector<8x128xf32>
    %40 = arith.addf %37, %39 : vector<8x128xf32>
    %41 = vector.extract_strided_slice %21 {offsets = [56, 0], sizes = [8, 128], strides = [1, 1]} : vector<256x128xf32> to vector<8x128xf32>
    %c28_i32 = arith.constant 28 : i32
    %42 = tpu.dynamic_rotate %41 by %c28_i32 dim 1 : vector<8x128xf32>, i32 -> vector<8x128xf32>
    %43 = arith.addf %40, %42 : vector<8x128xf32>
    %44 = vector.extract_strided_slice %21 {offsets = [64, 0], sizes = [8, 128], strides = [1, 1]} : vector<256x128xf32> to vector<8x128xf32>
    %c32_i32 = arith.constant 32 : i32
    %45 = tpu.dynamic_rotate %44 by %c32_i32 dim 1 : vector<8x128xf32>, i32 -> vector<8x128xf32>
    %46 = arith.addf %43, %45 : vector<8x128xf32>
    %47 = vector.extract_strided_slice %21 {offsets = [72, 0], sizes = [8, 128], strides = [1, 1]} : vector<256x128xf32> to vector<8x128xf32>
    %c36_i32 = arith.constant 36 : i32
    %48 = tpu.dynamic_rotate %47 by %c36_i32 dim 1 : vector<8x128xf32>, i32 -> vector<8x128xf32>
    %49 = arith.addf %46, %48 : vector<8x128xf32>
    %50 = vector.extract_strided_slice %21 {offsets = [80, 0], sizes = [8, 128], strides = [1, 1]} : vector<256x128xf32> to vector<8x128xf32>
    %c40_i32 = arith.constant 40 : i32
    %51 = tpu.dynamic_rotate %50 by %c40_i32 dim 1 : vector<8x128xf32>, i32 -> vector<8x128xf32>
    %52 = arith.addf %49, %51 : vector<8x128xf32>
    %53 = vector.extract_strided_slice %21 {offsets = [88, 0], sizes = [8, 128], strides = [1, 1]} : vector<256x128xf32> to vector<8x128xf32>
    %c44_i32 = arith.constant 44 : i32
    %54 = tpu.dynamic_rotate %53 by %c44_i32 dim 1 : vector<8x128xf32>, i32 -> vector<8x128xf32>
    %55 = arith.addf %52, %54 : vector<8x128xf32>
    %56 = vector.extract_strided_slice %21 {offsets = [96, 0], sizes = [8, 128], strides = [1, 1]} : vector<256x128xf32> to vector<8x128xf32>
    %c48_i32 = arith.constant 48 : i32
    %57 = tpu.dynamic_rotate %56 by %c48_i32 dim 1 : vector<8x128xf32>, i32 -> vector<8x128xf32>
    %58 = arith.addf %55, %57 : vector<8x128xf32>
    %59 = vector.extract_strided_slice %21 {offsets = [104, 0], sizes = [8, 128], strides = [1, 1]} : vector<256x128xf32> to vector<8x128xf32>
    %c52_i32 = arith.constant 52 : i32
    %60 = tpu.dynamic_rotate %59 by %c52_i32 dim 1 : vector<8x128xf32>, i32 -> vector<8x128xf32>
    %61 = arith.addf %58, %60 : vector<8x128xf32>
    %62 = vector.extract_strided_slice %21 {offsets = [112, 0], sizes = [8, 128], strides = [1, 1]} : vector<256x128xf32> to vector<8x128xf32>
    %c56_i32 = arith.constant 56 : i32
    %63 = tpu.dynamic_rotate %62 by %c56_i32 dim 1 : vector<8x128xf32>, i32 -> vector<8x128xf32>
    %64 = arith.addf %61, %63 : vector<8x128xf32>
    %65 = vector.extract_strided_slice %21 {offsets = [120, 0], sizes = [8, 128], strides = [1, 1]} : vector<256x128xf32> to vector<8x128xf32>
    %c60_i32 = arith.constant 60 : i32
    %66 = tpu.dynamic_rotate %65 by %c60_i32 dim 1 : vector<8x128xf32>, i32 -> vector<8x128xf32>
    %67 = arith.addf %64, %66 : vector<8x128xf32>
    %68 = vector.extract_strided_slice %21 {offsets = [128, 0], sizes = [8, 128], strides = [1, 1]} : vector<256x128xf32> to vector<8x128xf32>
    %c64_i32 = arith.constant 64 : i32
    %69 = tpu.dynamic_rotate %68 by %c64_i32 dim 1 : vector<8x128xf32>, i32 -> vector<8x128xf32>
    %70 = arith.addf %67, %69 : vector<8x128xf32>
    %71 = vector.extract_strided_slice %21 {offsets = [136, 0], sizes = [8, 128], strides = [1, 1]} : vector<256x128xf32> to vector<8x128xf32>
    %c68_i32 = arith.constant 68 : i32
    %72 = tpu.dynamic_rotate %71 by %c68_i32 dim 1 : vector<8x128xf32>, i32 -> vector<8x128xf32>
    %73 = arith.addf %70, %72 : vector<8x128xf32>
    %74 = vector.extract_strided_slice %21 {offsets = [144, 0], sizes = [8, 128], strides = [1, 1]} : vector<256x128xf32> to vector<8x128xf32>
    %c72_i32 = arith.constant 72 : i32
    %75 = tpu.dynamic_rotate %74 by %c72_i32 dim 1 : vector<8x128xf32>, i32 -> vector<8x128xf32>
    %76 = arith.addf %73, %75 : vector<8x128xf32>
    %77 = vector.extract_strided_slice %21 {offsets = [152, 0], sizes = [8, 128], strides = [1, 1]} : vector<256x128xf32> to vector<8x128xf32>
    %c76_i32 = arith.constant 76 : i32
    %78 = tpu.dynamic_rotate %77 by %c76_i32 dim 1 : vector<8x128xf32>, i32 -> vector<8x128xf32>
    %79 = arith.addf %76, %78 : vector<8x128xf32>
    %80 = vector.extract_strided_slice %21 {offsets = [160, 0], sizes = [8, 128], strides = [1, 1]} : vector<256x128xf32> to vector<8x128xf32>
    %c80_i32 = arith.constant 80 : i32
    %81 = tpu.dynamic_rotate %80 by %c80_i32 dim 1 : vector<8x128xf32>, i32 -> vector<8x128xf32>
    %82 = arith.addf %79, %81 : vector<8x128xf32>
    %83 = vector.extract_strided_slice %21 {offsets = [168, 0], sizes = [8, 128], strides = [1, 1]} : vector<256x128xf32> to vector<8x128xf32>
    %c84_i32 = arith.constant 84 : i32
    %84 = tpu.dynamic_rotate %83 by %c84_i32 dim 1 : vector<8x128xf32>, i32 -> vector<8x128xf32>
    %85 = arith.addf %82, %84 : vector<8x128xf32>
    %86 = vector.extract_strided_slice %21 {offsets = [176, 0], sizes = [8, 128], strides = [1, 1]} : vector<256x128xf32> to vector<8x128xf32>
    %c88_i32 = arith.constant 88 : i32
    %87 = tpu.dynamic_rotate %86 by %c88_i32 dim 1 : vector<8x128xf32>, i32 -> vector<8x128xf32>
    %88 = arith.addf %85, %87 : vector<8x128xf32>
    %89 = vector.extract_strided_slice %21 {offsets = [184, 0], sizes = [8, 128], strides = [1, 1]} : vector<256x128xf32> to vector<8x128xf32>
    %c92_i32 = arith.constant 92 : i32
    %90 = tpu.dynamic_rotate %89 by %c92_i32 dim 1 : vector<8x128xf32>, i32 -> vector<8x128xf32>
    %91 = arith.addf %88, %90 : vector<8x128xf32>
    %92 = vector.extract_strided_slice %21 {offsets = [192, 0], sizes = [8, 128], strides = [1, 1]} : vector<256x128xf32> to vector<8x128xf32>
    %c96_i32 = arith.constant 96 : i32
    %93 = tpu.dynamic_rotate %92 by %c96_i32 dim 1 : vector<8x128xf32>, i32 -> vector<8x128xf32>
    %94 = arith.addf %91, %93 : vector<8x128xf32>
    %95 = vector.extract_strided_slice %21 {offsets = [200, 0], sizes = [8, 128], strides = [1, 1]} : vector<256x128xf32> to vector<8x128xf32>
    %c100_i32 = arith.constant 100 : i32
    %96 = tpu.dynamic_rotate %95 by %c100_i32 dim 1 : vector<8x128xf32>, i32 -> vector<8x128xf32>
    %97 = arith.addf %94, %96 : vector<8x128xf32>
    %98 = vector.extract_strided_slice %21 {offsets = [208, 0], sizes = [8, 128], strides = [1, 1]} : vector<256x128xf32> to vector<8x128xf32>
    %c104_i32 = arith.constant 104 : i32
    %99 = tpu.dynamic_rotate %98 by %c104_i32 dim 1 : vector<8x128xf32>, i32 -> vector<8x128xf32>
    %100 = arith.addf %97, %99 : vector<8x128xf32>
    %101 = vector.extract_strided_slice %21 {offsets = [216, 0], sizes = [8, 128], strides = [1, 1]} : vector<256x128xf32> to vector<8x128xf32>
    %c108_i32 = arith.constant 108 : i32
    %102 = tpu.dynamic_rotate %101 by %c108_i32 dim 1 : vector<8x128xf32>, i32 -> vector<8x128xf32>
    %103 = arith.addf %100, %102 : vector<8x128xf32>
    %104 = vector.extract_strided_slice %21 {offsets = [224, 0], sizes = [8, 128], strides = [1, 1]} : vector<256x128xf32> to vector<8x128xf32>
    %c112_i32 = arith.constant 112 : i32
    %105 = tpu.dynamic_rotate %104 by %c112_i32 dim 1 : vector<8x128xf32>, i32 -> vector<8x128xf32>
    %106 = arith.addf %103, %105 : vector<8x128xf32>
    %107 = vector.extract_strided_slice %21 {offsets = [232, 0], sizes = [8, 128], strides = [1, 1]} : vector<256x128xf32> to vector<8x128xf32>
    %c116_i32 = arith.constant 116 : i32
    %108 = tpu.dynamic_rotate %107 by %c116_i32 dim 1 : vector<8x128xf32>, i32 -> vector<8x128xf32>
    %109 = arith.addf %106, %108 : vector<8x128xf32>
    %110 = vector.extract_strided_slice %21 {offsets = [240, 0], sizes = [8, 128], strides = [1, 1]} : vector<256x128xf32> to vector<8x128xf32>
    %c120_i32 = arith.constant 120 : i32
    %111 = tpu.dynamic_rotate %110 by %c120_i32 dim 1 : vector<8x128xf32>, i32 -> vector<8x128xf32>
    %112 = arith.addf %109, %111 : vector<8x128xf32>
    %113 = vector.extract_strided_slice %21 {offsets = [248, 0], sizes = [8, 128], strides = [1, 1]} : vector<256x128xf32> to vector<8x128xf32>
    %c124_i32 = arith.constant 124 : i32
    %114 = tpu.dynamic_rotate %113 by %c124_i32 dim 1 : vector<8x128xf32>, i32 -> vector<8x128xf32>
    %115 = arith.addf %112, %114 : vector<8x128xf32>
    %c0_13 = arith.constant 0 : index
    %c0_14 = arith.constant 0 : index
    %116 = vector.load %arg6[%c0_13, %c0_14] : memref<8x128xf32, #tpu.memory_space<vmem>>, vector<8x128xf32>
    tpu.vector_store %arg6[%c0_13, %c0_14], %115 {strides = array<i32>} : memref<8x128xf32, #tpu.memory_space<vmem>>, vector<8x128xf32>,
    return
  }
  func.func @transform_0(%arg0: i32) -> (i32, i32) {
    %c0_i32 = arith.constant 0 : i32
    %c0_i32_0 = arith.constant 0 : i32
    return %arg0, %c0_i32 : i32, i32
  }
  func.func @transform_1(%arg0: i32) -> (i32, i32) {
    %c0_i32 = arith.constant 0 : i32
    %c0_i32_0 = arith.constant 0 : i32
    %c0_i32_1 = arith.constant 0 : i32
    return %c0_i32, %c0_i32_0 : i32, i32
  }
  func.func @transform_2(%arg0: i32) -> (i32, i32) {
    %c0_i32 = arith.constant 0 : i32
    %c0_i32_0 = arith.constant 0 : i32
    %c0_i32_1 = arith.constant 0 : i32
    return %c0_i32, %c0_i32_0 : i32, i32
  }
  func.func @transform_3(%arg0: i32) -> (i32, i32) {
    %c0_i32 = arith.constant 0 : i32
    %c0_i32_0 = arith.constant 0 : i32
    %c0_i32_1 = arith.constant 0 : i32
    return %c0_i32, %c0_i32_0 : i32, i32
  }
  func.func @transform_4(%arg0: i32) -> (i32, i32) {
    %c0_i32 = arith.constant 0 : i32
    %c0_i32_0 = arith.constant 0 : i32
    %c0_i32_1 = arith.constant 0 : i32
    return %c0_i32, %c0_i32_0 : i32, i32
  }
  func.func @transform_5(%arg0: i32) -> (i32, i32) {
    %c0_i32 = arith.constant 0 : i32
    %c0_i32_0 = arith.constant 0 : i32
    return %arg0, %c0_i32 : i32, i32
  }
}

</mosaic_0001>

<llo_original>
// kernel: tpu_custom_call.1
$region0: #{tpu_custom_call.1}
  #allocation0 [shape = 'u32[]', space=smem, size = 0x4, offset = 0x4, fixed_abs, tag = 'smem constant byte address 0x4 - core index']
  #allocation1 [shape = 'u32[72,128]{1,0:T(1,128)}', space=vmem, size = 0x9000, scoped, tag = 'internal scratch']
  %s0 = inlined_call_operand.vmem [shape: f32[512,4], index: 0, kind: input, shape index: {}]
  %s1 = inlined_call_operand.vmem [shape: f32[4,128], index: 1, kind: input, shape index: {}]
  %s2 = inlined_call_operand.vmem [shape: f32[1,128], index: 2, kind: input, shape index: {}]
  %s3 = inlined_call_operand.vmem [shape: f32[128,128], index: 3, kind: input, shape index: {}]
  %s4 = inlined_call_operand.vmem [shape: f32[1,128], index: 4, kind: input, shape index: {}]
  %s5 = inlined_call_operand.hbm [shape: f32[16,128], index: 5, kind: output, shape index: {}]
  %s6 = sld [smem:[#allocation0]]
  $region53: #{tpu_custom_call.1} parent=0
    _
  %s8 = ssub.s32 1, %s6
  %s9 = scalar_select 0, %s8, %s6
  $region1: #{tpu_custom_call.1} parent=0
    #allocation2 [shape = 'u8[8192]{0}', space=vmem, size = 0x2000, scoped, tag = 'output window, operand 0']
    #allocation3 [shape = 's32[2]{0}', space=sflag, size = 0x8, scoped, tag = 'scoped memory for tpu_custom_call.1']
    %10 = vsyncpa [#allocation3], 0
    %s11 = scalar_lea.sflag [#allocation3], 1
    %12 = vsyncpa %s11, 0
    loop: start=0, step=1, limit=4
    $region2: #{tpu_custom_call.1} parent=1 // loop_pre_header
      _
    $region3: #{tpu_custom_call.1} parent=1 // loop_header
      %s14 = sphi 0, %s18
      %p15 = scmp.ge.s32.totalorder %s14, 4
      %s24 = sphi 0, %s26
      %s27 = sphi 0, %s24
      %s28 = sphi 0, %s27
      %s44 = sphi 0, %s28
      %s48 = sphi 0, %s48
      %s50 = sphi 0, %s48
      %s51 = sphi 0, %s50
      %s65 = sphi 0, %s51
      %s69 = sphi 0, %s69
      %s71 = sphi 0, %s69
      %s72 = sphi 0, %s71
      %s86 = sphi 0, %s72
      %s90 = sphi 0, %s90
      %s92 = sphi 0, %s90
      %s93 = sphi 0, %s92
      %s107 = sphi 0, %s93
      %s111 = sphi 0, %s111
      %s113 = sphi 0, %s111
      %s114 = sphi 0, %s113
      %s128 = sphi 0, %s114
      %s134 = sphi 0, %s136
      %s137 = sphi 0, %s134
      %s138 = sphi 0, %s137
      %s154 = sphi 0, %s138
    $region4: #{tpu_custom_call.1} parent=1 // loop_header_branch
      %17 = sbr.rel (%p15) target = $region8
    $region5: #{tpu_custom_call.1} parent=1 // loop_body
      %s19 = ssub.s32 %s14, 1
      %s20 = ssub.s32 %s14, 2
      %s21 = sadd.s32 %s14, 1
      %s22 = ssub.s32 %s14, %s21
      %p23 = scmp.eq.s32.totalorder %s22, 0
      %s25 = sadd.s32 %s24, 1
      %s26 = scalar_select %p23, %s24, %s25
      %p29 = pneg %p23
      %p30 = scmp.eq.s32.totalorder %s14, 1
      %p31 = por %p29, %p30
      %p32 = scmp.ne.s32.totalorder %s24, %s27
      %p33 = scmp.eq.s32.totalorder %s14, 0
      %p34 = por %p32, %p33
      %p35 = scmp.ne.s32.totalorder %s24, %s27
      %p36 = scmp.eq.s32.totalorder %s19, 1
      %p37 = por %p35, %p36
      %p38 = scmp.ne.s32.totalorder %s27, %s28
      %p39 = scmp.eq.s32.totalorder %s19, 0
      %p40 = por %p38, %p39
      %p41 = scmp.ne.s32.totalorder %s27, %s28
      %p42 = scmp.eq.s32.totalorder %s20, 1
      %p43 = por %p41, %p42
      %p45 = scmp.ne.s32.totalorder %s28, %s44
      %p46 = scmp.eq.s32.totalorder %s20, 0
      %p47 = por %p45, %p46
      %s49 = sadd.s32 %s48, 1
      %p52 = scmp.eq.s32.totalorder %s14, 1
      %p53 = scmp.ne.s32.totalorder %s48, %s50
      %p54 = scmp.eq.s32.totalorder %s14, 0
      %p55 = por %p53, %p54
      %p56 = scmp.ne.s32.totalorder %s48, %s50
      %p57 = scmp.eq.s32.totalorder %s19, 1
      %p58 = por %p56, %p57
      %p59 = scmp.ne.s32.totalorder %s50, %s51
      %p60 = scmp.eq.s32.totalorder %s19, 0
      %p61 = por %p59, %p60
      %p62 = scmp.ne.s32.totalorder %s50, %s51
      %p63 = scmp.eq.s32.totalorder %s20, 1
      %p64 = por %p62, %p63
      %p66 = scmp.ne.s32.totalorder %s51, %s65
      %p67 = scmp.eq.s32.totalorder %s20, 0
      %p68 = por %p66, %p67
      %s70 = sadd.s32 %s69, 1
      %p73 = scmp.eq.s32.totalorder %s14, 1
      %p74 = scmp.ne.s32.totalorder %s69, %s71
      %p75 = scmp.eq.s32.totalorder %s14, 0
      %p76 = por %p74, %p75
      %p77 = scmp.ne.s32.totalorder %s69, %s71
      %p78 = scmp.eq.s32.totalorder %s19, 1
      %p79 = por %p77, %p78
      %p80 = scmp.ne.s32.totalorder %s71, %s72
      %p81 = scmp.eq.s32.totalorder %s19, 0
      %p82 = por %p80, %p81
      %p83 = scmp.ne.s32.totalorder %s71, %s72
      %p84 = scmp.eq.s32.totalorder %s20, 1
      %p85 = por %p83, %p84
      %p87 = scmp.ne.s32.totalorder %s72, %s86
      %p88 = scmp.eq.s32.totalorder %s20, 0
      %p89 = por %p87, %p88
      %s91 = sadd.s32 %s90, 1
      %p94 = scmp.eq.s32.totalorder %s14, 1
      %p95 = scmp.ne.s32.totalorder %s90, %s92
      %p96 = scmp.eq.s32.totalorder %s14, 0
      %p97 = por %p95, %p96
      %p98 = scmp.ne.s32.totalorder %s90, %s92
      %p99 = scmp.eq.s32.totalorder %s19, 1
      %p100 = por %p98, %p99
      %p101 = scmp.ne.s32.totalorder %s92, %s93
      %p102 = scmp.eq.s32.totalorder %s19, 0
      %p103 = por %p101, %p102
      %p104 = scmp.ne.s32.totalorder %s92, %s93
      %p105 = scmp.eq.s32.totalorder %s20, 1
      %p106 = por %p104, %p105
      %p108 = scmp.ne.s32.totalorder %s93, %s107
      %p109 = scmp.eq.s32.totalorder %s20, 0
      %p110 = por %p108, %p109
      %s112 = sadd.s32 %s111, 1
      %p115 = scmp.eq.s32.totalorder %s14, 1
      %p116 = scmp.ne.s32.totalorder %s111, %s113
      %p117 = scmp.eq.s32.totalorder %s14, 0
      %p118 = por %p116, %p117
      %p119 = scmp.ne.s32.totalorder %s111, %s113
      %p120 = scmp.eq.s32.totalorder %s19, 1
      %p121 = por %p119, %p120
      %p122 = scmp.ne.s32.totalorder %s113, %s114
      %p123 = scmp.eq.s32.totalorder %s19, 0
      %p124 = por %p122, %p123
      %p125 = scmp.ne.s32.totalorder %s113, %s114
      %p126 = scmp.eq.s32.totalorder %s20, 1
      %p127 = por %p125, %p126
      %p129 = scmp.ne.s32.totalorder %s114, %s128
      %p130 = scmp.eq.s32.totalorder %s20, 0
      %p131 = por %p129, %p130
      %s132 = ssub.s32 %s14, %s21
      %p133 = scmp.eq.s32.totalorder %s132, 0
      %s135 = sadd.s32 %s134, 1
      %s136 = scalar_select %p133, %s134, %s135
      %p139 = pneg %p133
      %p140 = scmp.eq.s32.totalorder %s14, 1
      %p141 = por %p139, %p140
      %p142 = scmp.ne.s32.totalorder %s134, %s137
      %p143 = scmp.eq.s32.totalorder %s14, 0
      %p144 = por %p142, %p143
      %p145 = scmp.ne.s32.totalorder %s134, %s137
      %p146 = scmp.eq.s32.totalorder %s19, 1
      %p147 = por %p145, %p146
      %p148 = scmp.ne.s32.totalorder %s137, %s138
      %p149 = scmp.eq.s32.totalorder %s19, 0
      %p150 = por %p148, %p149
      %p151 = scmp.ne.s32.totalorder %s137, %s138
      %p152 = scmp.eq.s32.totalorder %s20, 1
      %p153 = por %p151, %p152
      %p155 = scmp.ne.s32.totalorder %s138, %s154
      %p156 = scmp.eq.s32.totalorder %s20, 0
      %p157 = por %p155, %p156
      %p158 = scmp.le.s32.totalorder 1, %s14
      %p159 = scmp.lt.s32.totalorder %s14, 3
      %p160 = pnand %p158, %p159
      %p161 = pneg %p160
      // Predicated region
      $region9: #{tpu_custom_call.1} parent=5 // pred_check
        _
      $region10: #{tpu_custom_call.1} parent=5 // pred_check_branch
        %163 = sbr.rel (%p160) target = $region12
      $region11: #{tpu_custom_call.1} parent=5 // pred_region
        %s164 = ssub.s32 %s14, 1
        // Predicated region
        $region13: #{tpu_custom_call.1} parent=11 // pred_check
          %p165 = pneg %p61
        $region14: #{tpu_custom_call.1} parent=11 // pred_check_branch
          %167 = sbr.rel (%p165) target = $region16
        $region15: #{tpu_custom_call.1} parent=11 // pred_region
          _
        $region16: #{tpu_custom_call.1} parent=11 // pred_fallthru
          _
        // Predicated region
        $region17: #{tpu_custom_call.1} parent=11 // pred_check
          %p168 = pneg %p82
        $region18: #{tpu_custom_call.1} parent=11 // pred_check_branch
          %170 = sbr.rel (%p168) target = $region20
        $region19: #{tpu_custom_call.1} parent=11 // pred_region
          _
        $region20: #{tpu_custom_call.1} parent=11 // pred_fallthru
          _
        // Predicated region
        $region21: #{tpu_custom_call.1} parent=11 // pred_check
          %p171 = pneg %p103
        $region22: #{tpu_custom_call.1} parent=11 // pred_check_branch
          %173 = sbr.rel (%p171) target = $region24
        $region23: #{tpu_custom_call.1} parent=11 // pred_region
          _
        $region24: #{tpu_custom_call.1} parent=11 // pred_fallthru
          _
        // Predicated region
        $region25: #{tpu_custom_call.1} parent=11 // pred_check
          %p174 = pneg %p124
        $region26: #{tpu_custom_call.1} parent=11 // pred_check_branch
          %176 = sbr.rel (%p174) target = $region28
        $region27: #{tpu_custom_call.1} parent=11 // pred_region
          _
        $region28: #{tpu_custom_call.1} parent=11 // pred_fallthru
          _
      $region12: #{tpu_custom_call.1} parent=5 // pred_fallthru
        _
      %p177 = scmp.lt.s32.totalorder %s14, 2
      // Predicated region
      $region29: #{tpu_custom_call.1} parent=5 // pred_check
        %p178 = pneg %p177
      $region30: #{tpu_custom_call.1} parent=5 // pred_check_branch
        %180 = sbr.rel (%p178) target = $region32
      $region31: #{tpu_custom_call.1} parent=5 // pred_region
        // Predicated region
        $region33: #{tpu_custom_call.1} parent=31 // pred_check
          %p181 = pneg %p34
        $region34: #{tpu_custom_call.1} parent=31 // pred_check_branch
          %183 = sbr.rel (%p181) target = $region36
        $region35: #{tpu_custom_call.1} parent=31 // pred_region
          %s184 = smul.u32 32, %s14
          %p185 = scmp.lt.s32.totalorder %s184, 63
          %s186 = scalar_select %p185, %s184, 63
          %s187 = smul.addr %s186, 8
          %s188 = scalar_lea.vmem %s0, %s187
          %s189 = smul.u32 32, %s14
        $region36: #{tpu_custom_call.1} parent=31 // pred_fallthru
          _
      $region32: #{tpu_custom_call.1} parent=5 // pred_fallthru
        _
      %p190 = scmp.le.s32.totalorder 1, %s14
      %p191 = scmp.lt.s32.totalorder %s14, 3
      %p192 = pnand %p190, %p191
      %p193 = pneg %p192
      // Predicated region
      $region37: #{tpu_custom_call.1} parent=5 // pred_check
        _
      $region38: #{tpu_custom_call.1} parent=5 // pred_check_branch
        %195 = sbr.rel (%p192) target = $region40
      $region39: #{tpu_custom_call.1} parent=5 // pred_region
        %s196 = ssub.s32 %s14, 1
        %s197 = smul.u32 32, %s19
        %p198 = scmp.lt.s32.totalorder %s197, 63
        %s199 = scalar_select %p198, %s197, 63
        %s200 = smul.addr %s199, 8
        %s201 = scalar_lea.vmem %s0, %s200
        %p202 = pneg %p40
        %p203 = pneg %p37
        %p204 = pneg %p61
        %p205 = pneg %p58
        %p206 = pneg %p82
        %p207 = pneg %p79
        %p208 = pneg %p103
        %p209 = pneg %p100
        %p210 = pneg %p124
        %p211 = pneg %p121
        %p212 = pneg %p150
        %p213 = pneg %p147
        %s214 = sand.u32 %s137, 1
        %s215 = scalar_lea.sflag [#allocation3], %s214
        %s216 = sand.u32 %s137, 1
        %s217 = smul.addr %s216, 8
        %s218 = scalar_lea.vmem [#allocation2], %s217
        %s219 = smul.u32 32, %s19
        %p220 = scmp.lt.s32.totalorder %s219, 63
        %s221 = scalar_select %p220, %s219, 63
        %s222 = smul.addr %s221, 8
        %s223 = scalar_lea.vmem %s0, %s222
        %s224 = smul.u32 32, %s19
        %v225 = vld [vmem:[%s223] sm:$0xff]
        %v226 = vld [vmem:[%s223 + $0x8] sm:$0xff]
        %v227 = vld [vmem:[%s223 + $0x10] sm:$0xff]
        %v228 = vld [vmem:[%s223 + $0x18] sm:$0xff]
        %v229 = vld [vmem:[%s223 + $0x20] sm:$0xff]
        %v230 = vld [vmem:[%s223 + $0x28] sm:$0xff]
        %v231 = vld [vmem:[%s223 + $0x30] sm:$0xff]
        %v232 = vld [vmem:[%s223 + $0x38] sm:$0xff]
        %v233 = vld [vmem:[%s223 + $0x40] sm:$0xff]
        %v234 = vld [vmem:[%s223 + $0x48] sm:$0xff]
        %v235 = vld [vmem:[%s223 + $0x50] sm:$0xff]
        %v236 = vld [vmem:[%s223 + $0x58] sm:$0xff]
        %v237 = vld [vmem:[%s223 + $0x60] sm:$0xff]
        %v238 = vld [vmem:[%s223 + $0x68] sm:$0xff]
        %v239 = vld [vmem:[%s223 + $0x70] sm:$0xff]
        %v240 = vld [vmem:[%s223 + $0x78] sm:$0xff]
        %v241 = vld [vmem:[%s223 + $0x80] sm:$0xff]
        %v242 = vld [vmem:[%s223 + $0x88] sm:$0xff]
        %v243 = vld [vmem:[%s223 + $0x90] sm:$0xff]
        %v244 = vld [vmem:[%s223 + $0x98] sm:$0xff]
        %v245 = vld [vmem:[%s223 + $0xa0] sm:$0xff]
        %v246 = vld [vmem:[%s223 + $0xa8] sm:$0xff]
        %v247 = vld [vmem:[%s223 + $0xb0] sm:$0xff]
        %v248 = vld [vmem:[%s223 + $0xb8] sm:$0xff]
        %v249 = vld [vmem:[%s223 + $0xc0] sm:$0xff]
        %v250 = vld [vmem:[%s223 + $0xc8] sm:$0xff]
        %v251 = vld [vmem:[%s223 + $0xd0] sm:$0xff]
        %v252 = vld [vmem:[%s223 + $0xd8] sm:$0xff]
        %v253 = vld [vmem:[%s223 + $0xe0] sm:$0xff]
        %v254 = vld [vmem:[%s223 + $0xe8] sm:$0xff]
        %v255 = vld [vmem:[%s223 + $0xf0] sm:$0xff]
        %v256 = vld [vmem:[%s223 + $0xf8] sm:$0xff]
        %v257 = vld [vmem:[%s1] sm:$0xf]
        %v258 = vld [vmem:[%s2] sm:$0x1]
        %v260 = vperm.slane %v258, 0
        %vm262 = vcmask 31744
        %v264 = vsel %vm262, %v225, 0
        %v267 = vsel %vm262, %v226, 0
        %v270 = vsel %vm262, %v227, 0
        %v273 = vsel %vm262, %v228, 0
        %v276 = vsel %vm262, %v229, 0
        %v279 = vsel %vm262, %v230, 0
        %v282 = vsel %vm262, %v231, 0
        %v285 = vsel %vm262, %v232, 0
        %v288 = vsel %vm262, %v233, 0
        %v291 = vsel %vm262, %v234, 0
        %v294 = vsel %vm262, %v235, 0
        %v297 = vsel %vm262, %v236, 0
        %v300 = vsel %vm262, %v237, 0
        %v303 = vsel %vm262, %v238, 0
        %v306 = vsel %vm262, %v239, 0
        %v309 = vsel %vm262, %v240, 0
        %v312 = vsel %vm262, %v241, 0
        %v315 = vsel %vm262, %v242, 0
        %v318 = vsel %vm262, %v243, 0
        %v321 = vsel %vm262, %v244, 0
        %v324 = vsel %vm262, %v245, 0
        %v327 = vsel %vm262, %v246, 0
        %v330 = vsel %vm262, %v247, 0
        %v333 = vsel %vm262, %v248, 0
        %v336 = vsel %vm262, %v249, 0
        %v339 = vsel %vm262, %v250, 0
        %v342 = vsel %vm262, %v251, 0
        %v345 = vsel %vm262, %v252, 0
        %v348 = vsel %vm262, %v253, 0
        %v351 = vsel %vm262, %v254, 0
        %v354 = vsel %vm262, %v255, 0
        %v357 = vsel %vm262, %v256, 0
        %vm359 = vcmask 1043456
        %v361 = vsel %vm359, %v257, 0
        %363 = vmatpush.msra.mxu0 0.0
        %364 = vmatpush.msra.mxu0 0.0
        %365 = vmatpush.msra.mxu0 0.0
        %366 = vmatpush.msra.mxu0 0.0
        %367 = vmatpush.msra.mxu0 0.0
        %368 = vmatpush.msra.mxu0 0.0
        %369 = vmatpush.msra.mxu0 0.0
        %370 = vmatpush.msra.mxu0 0.0
        %371 = vmatpush.msra.mxu0 0.0
        %372 = vmatpush.msra.mxu0 0.0
        %373 = vmatpush.msra.mxu0 0.0
        %374 = vmatpush.msra.mxu0 0.0
        %375 = vmatpush.msra.mxu0 0.0
        %376 = vmatpush.msra.mxu0 0.0
        %377 = vmatpush.msra.mxu0 0.0
        %378 = vmatpush.msra.mxu0 %v361
        %379 = vmatmul.f32.gmra.mxu0 %v264
        %v380 = vpop.f32.mrf.mxu0
        %v381 = vadd.f32 %v260, %v380
        %382 = vmatmul.f32.gmra.mxu0 %v267
        %v383 = vpop.f32.mrf.mxu0
        %v384 = vadd.f32 %v260, %v383
        %385 = vmatmul.f32.gmra.mxu0 %v270
        %v386 = vpop.f32.mrf.mxu0
        %v387 = vadd.f32 %v260, %v386
        %388 = vmatmul.f32.gmra.mxu0 %v273
        %v389 = vpop.f32.mrf.mxu0
        %v390 = vadd.f32 %v260, %v389
        %391 = vmatmul.f32.gmra.mxu0 %v276
        %v392 = vpop.f32.mrf.mxu0
        %v393 = vadd.f32 %v260, %v392
        %394 = vmatmul.f32.gmra.mxu0 %v279
        %v395 = vpop.f32.mrf.mxu0
        %v396 = vadd.f32 %v260, %v395
        %397 = vmatmul.f32.gmra.mxu0 %v282
        %v398 = vpop.f32.mrf.mxu0
        %v399 = vadd.f32 %v260, %v398
        %400 = vmatmul.f32.gmra.mxu0 %v285
        %v401 = vpop.f32.mrf.mxu0
        %v402 = vadd.f32 %v260, %v401
        %403 = vmatmul.f32.gmra.mxu0 %v288
        %v404 = vpop.f32.mrf.mxu0
        %v405 = vadd.f32 %v260, %v404
        %406 = vmatmul.f32.gmra.mxu0 %v291
        %v407 = vpop.f32.mrf.mxu0
        %v408 = vadd.f32 %v260, %v407
        %409 = vmatmul.f32.gmra.mxu0 %v294
        %v410 = vpop.f32.mrf.mxu0
        %v411 = vadd.f32 %v260, %v410
        %412 = vmatmul.f32.gmra.mxu0 %v297
        %v413 = vpop.f32.mrf.mxu0
        %v414 = vadd.f32 %v260, %v413
        %415 = vmatmul.f32.gmra.mxu0 %v300
        %v416 = vpop.f32.mrf.mxu0
        %v417 = vadd.f32 %v260, %v416
        %418 = vmatmul.f32.gmra.mxu0 %v303
        %v419 = vpop.f32.mrf.mxu0
        %v420 = vadd.f32 %v260, %v419
        %421 = vmatmul.f32.gmra.mxu0 %v306
        %v422 = vpop.f32.mrf.mxu0
        %v423 = vadd.f32 %v260, %v422
        %424 = vmatmul.f32.gmra.mxu0 %v309
        %v425 = vpop.f32.mrf.mxu0
        %v426 = vadd.f32 %v260, %v425
        %427 = vmatmul.f32.gmra.mxu0 %v312
        %v428 = vpop.f32.mrf.mxu0
        %v429 = vadd.f32 %v260, %v428
        %430 = vmatmul.f32.gmra.mxu0 %v315
        %v431 = vpop.f32.mrf.mxu0
        %v432 = vadd.f32 %v260, %v431
        %433 = vmatmul.f32.gmra.mxu0 %v318
        %v434 = vpop.f32.mrf.mxu0
        %v435 = vadd.f32 %v260, %v434
        %436 = vmatmul.f32.gmra.mxu0 %v321
        %v437 = vpop.f32.mrf.mxu0
        %v438 = vadd.f32 %v260, %v437
        %439 = vmatmul.f32.gmra.mxu0 %v324
        %v440 = vpop.f32.mrf.mxu0
        %v441 = vadd.f32 %v260, %v440
        %442 = vmatmul.f32.gmra.mxu0 %v327
        %v443 = vpop.f32.mrf.mxu0
        %v444 = vadd.f32 %v260, %v443
        %445 = vmatmul.f32.gmra.mxu0 %v330
        %v446 = vpop.f32.mrf.mxu0
        %v447 = vadd.f32 %v260, %v446
        %448 = vmatmul.f32.gmra.mxu0 %v333
        %v449 = vpop.f32.mrf.mxu0
        %v450 = vadd.f32 %v260, %v449
        %451 = vmatmul.f32.gmra.mxu0 %v336
        %v452 = vpop.f32.mrf.mxu0
        %v453 = vadd.f32 %v260, %v452
        %454 = vmatmul.f32.gmra.mxu0 %v339
        %v455 = vpop.f32.mrf.mxu0
        %v456 = vadd.f32 %v260, %v455
        %457 = vmatmul.f32.gmra.mxu0 %v342
        %v458 = vpop.f32.mrf.mxu0
        %v459 = vadd.f32 %v260, %v458
        %460 = vmatmul.f32.gmra.mxu0 %v345
        %v461 = vpop.f32.mrf.mxu0
        %v462 = vadd.f32 %v260, %v461
        %463 = vmatmul.f32.gmra.mxu0 %v348
        %v464 = vpop.f32.mrf.mxu0
        %v465 = vadd.f32 %v260, %v464
        %466 = vmatmul.f32.gmra.mxu0 %v351
        %v467 = vpop.f32.mrf.mxu0
        %v468 = vadd.f32 %v260, %v467
        %469 = vmatmul.f32.gmra.mxu0 %v354
        %v470 = vpop.f32.mrf.mxu0
        %v471 = vadd.f32 %v260, %v470
        %472 = vmatmul.f32.gmra.mxu0 %v357
        %v473 = vpop.f32.mrf.mxu0
        %v474 = vadd.f32 %v260, %v473
        %475 = vdwg.mxu0
        %v476 = vmax.f32 %v381, 0.0
        %v477 = vmax.f32 %v384, 0.0
        %v478 = vmax.f32 %v387, 0.0
        %v479 = vmax.f32 %v390, 0.0
        %v480 = vmax.f32 %v393, 0.0
        %v481 = vmax.f32 %v396, 0.0
        %v482 = vmax.f32 %v399, 0.0
        %v483 = vmax.f32 %v402, 0.0
        %v484 = vmax.f32 %v405, 0.0
        %v485 = vmax.f32 %v408, 0.0
        %v486 = vmax.f32 %v411, 0.0
        %v487 = vmax.f32 %v414, 0.0
        %v488 = vmax.f32 %v417, 0.0
        %v489 = vmax.f32 %v420, 0.0
        %v490 = vmax.f32 %v423, 0.0
        %v491 = vmax.f32 %v426, 0.0
        %v492 = vmax.f32 %v429, 0.0
        %v493 = vmax.f32 %v432, 0.0
        %v494 = vmax.f32 %v435, 0.0
        %v495 = vmax.f32 %v438, 0.0
        %v496 = vmax.f32 %v441, 0.0
        %v497 = vmax.f32 %v444, 0.0
        %v498 = vmax.f32 %v447, 0.0
        %v499 = vmax.f32 %v450, 0.0
        %v500 = vmax.f32 %v453, 0.0
        %v501 = vmax.f32 %v456, 0.0
        %v502 = vmax.f32 %v459, 0.0
        %v503 = vmax.f32 %v462, 0.0
        %v504 = vmax.f32 %v465, 0.0
        %v505 = vmax.f32 %v468, 0.0
        %v506 = vmax.f32 %v471, 0.0
        %v507 = vmax.f32 %v474, 0.0
        %v508 = vld [vmem:[%s3] sm:$0xff]
        %v509 = vld [vmem:[%s3 + $0x8] sm:$0xff]
        %v510 = vld [vmem:[%s3 + $0x10] sm:$0xff]
        %v511 = vld [vmem:[%s3 + $0x18] sm:$0xff]
        %v512 = vld [vmem:[%s3 + $0x20] sm:$0xff]
        %v513 = vld [vmem:[%s3 + $0x28] sm:$0xff]
        %v514 = vld [vmem:[%s3 + $0x30] sm:$0xff]
        %v515 = vld [vmem:[%s3 + $0x38] sm:$0xff]
        %v516 = vld [vmem:[%s3 + $0x40] sm:$0xff]
        %v517 = vld [vmem:[%s3 + $0x48] sm:$0xff]
        %v518 = vld [vmem:[%s3 + $0x50] sm:$0xff]
        %v519 = vld [vmem:[%s3 + $0x58] sm:$0xff]
        %v520 = vld [vmem:[%s3 + $0x60] sm:$0xff]
        %v521 = vld [vmem:[%s3 + $0x68] sm:$0xff]
        %v522 = vld [vmem:[%s3 + $0x70] sm:$0xff]
        %v523 = vld [vmem:[%s3 + $0x78] sm:$0xff]
        %v524 = vld [vmem:[%s4] sm:$0x1]
        %v526 = vperm.slane %v524, 0
        %528 = vmatpush.msra.mxu0 %v523
        %529 = vmatpush.msra.mxu0 %v522
        %530 = vmatpush.msra.mxu0 %v521
        %531 = vmatpush.msra.mxu0 %v520
        %532 = vmatpush.msra.mxu0 %v519
        %533 = vmatpush.msra.mxu0 %v518
        %534 = vmatpush.msra.mxu0 %v517
        %535 = vmatpush.msra.mxu0 %v516
        %536 = vmatpush.msra.mxu0 %v515
        %537 = vmatpush.msra.mxu0 %v514
        %538 = vmatpush.msra.mxu0 %v513
        %539 = vmatpush.msra.mxu0 %v512
        %540 = vmatpush.msra.mxu0 %v511
        %541 = vmatpush.msra.mxu0 %v510
        %542 = vmatpush.msra.mxu0 %v509
        %543 = vmatpush.msra.mxu0 %v508
        %544 = vmatmul.f32.gmra.mxu0 %v476
        %v545 = vpop.f32.mrf.mxu0
        %v546 = vadd.f32 %v526, %v545
        %547 = vmatmul.f32.gmra.mxu0 %v477
        %v548 = vpop.f32.mrf.mxu0
        %v549 = vadd.f32 %v526, %v548
        %550 = vmatmul.f32.gmra.mxu0 %v478
        %v551 = vpop.f32.mrf.mxu0
        %v552 = vadd.f32 %v526, %v551
        %553 = vmatmul.f32.gmra.mxu0 %v479
        %v554 = vpop.f32.mrf.mxu0
        %v555 = vadd.f32 %v526, %v554
        %556 = vmatmul.f32.gmra.mxu0 %v480
        %v557 = vpop.f32.mrf.mxu0
        %v558 = vadd.f32 %v526, %v557
        %559 = vmatmul.f32.gmra.mxu0 %v481
        %v560 = vpop.f32.mrf.mxu0
        %v561 = vadd.f32 %v526, %v560
        %562 = vmatmul.f32.gmra.mxu0 %v482
        %v563 = vpop.f32.mrf.mxu0
        %v564 = vadd.f32 %v526, %v563
        %565 = vmatmul.f32.gmra.mxu0 %v483
        %v566 = vpop.f32.mrf.mxu0
        %v567 = vadd.f32 %v526, %v566
        %568 = vmatmul.f32.gmra.mxu0 %v484
        %v569 = vpop.f32.mrf.mxu0
        %v570 = vadd.f32 %v526, %v569
        %571 = vmatmul.f32.gmra.mxu0 %v485
        %v572 = vpop.f32.mrf.mxu0
        %v573 = vadd.f32 %v526, %v572
        %574 = vmatmul.f32.gmra.mxu0 %v486
        %v575 = vpop.f32.mrf.mxu0
        %v576 = vadd.f32 %v526, %v575
        %577 = vmatmul.f32.gmra.mxu0 %v487
        %v578 = vpop.f32.mrf.mxu0
        %v579 = vadd.f32 %v526, %v578
        %580 = vmatmul.f32.gmra.mxu0 %v488
        %v581 = vpop.f32.mrf.mxu0
        %v582 = vadd.f32 %v526, %v581
        %583 = vmatmul.f32.gmra.mxu0 %v489
        %v584 = vpop.f32.mrf.mxu0
        %v585 = vadd.f32 %v526, %v584
        %586 = vmatmul.f32.gmra.mxu0 %v490
        %v587 = vpop.f32.mrf.mxu0
        %v588 = vadd.f32 %v526, %v587
        %589 = vmatmul.f32.gmra.mxu0 %v491
        %v590 = vpop.f32.mrf.mxu0
        %v591 = vadd.f32 %v526, %v590
        %592 = vmatmul.f32.gmra.mxu0 %v492
        %v593 = vpop.f32.mrf.mxu0
        %v594 = vadd.f32 %v526, %v593
        %595 = vmatmul.f32.gmra.mxu0 %v493
        %v596 = vpop.f32.mrf.mxu0
        %v597 = vadd.f32 %v526, %v596
        %598 = vmatmul.f32.gmra.mxu0 %v494
        %v599 = vpop.f32.mrf.mxu0
        %v600 = vadd.f32 %v526, %v599
        %601 = vmatmul.f32.gmra.mxu0 %v495
        %v602 = vpop.f32.mrf.mxu0
        %v603 = vadd.f32 %v526, %v602
        %604 = vmatmul.f32.gmra.mxu0 %v496
        %v605 = vpop.f32.mrf.mxu0
        %v606 = vadd.f32 %v526, %v605
        %607 = vmatmul.f32.gmra.mxu0 %v497
        %v608 = vpop.f32.mrf.mxu0
        %v609 = vadd.f32 %v526, %v608
        %610 = vmatmul.f32.gmra.mxu0 %v498
        %v611 = vpop.f32.mrf.mxu0
        %v612 = vadd.f32 %v526, %v611
        %613 = vmatmul.f32.gmra.mxu0 %v499
        %v614 = vpop.f32.mrf.mxu0
        %v615 = vadd.f32 %v526, %v614
        %616 = vmatmul.f32.gmra.mxu0 %v500
        %v617 = vpop.f32.mrf.mxu0
        %v618 = vadd.f32 %v526, %v617
        %619 = vmatmul.f32.gmra.mxu0 %v501
        %v620 = vpop.f32.mrf.mxu0
        %v621 = vadd.f32 %v526, %v620
        %622 = vmatmul.f32.gmra.mxu0 %v502
        %v623 = vpop.f32.mrf.mxu0
        %v624 = vadd.f32 %v526, %v623
        %625 = vmatmul.f32.gmra.mxu0 %v503
        %v626 = vpop.f32.mrf.mxu0
        %v627 = vadd.f32 %v526, %v626
        %628 = vmatmul.f32.gmra.mxu0 %v504
        %v629 = vpop.f32.mrf.mxu0
        %v630 = vadd.f32 %v526, %v629
        %631 = vmatmul.f32.gmra.mxu0 %v505
        %v632 = vpop.f32.mrf.mxu0
        %v633 = vadd.f32 %v526, %v632
        %634 = vmatmul.f32.gmra.mxu0 %v506
        %v635 = vpop.f32.mrf.mxu0
        %v636 = vadd.f32 %v526, %v635
        %637 = vmatmul.f32.gmra.mxu0 %v507
        %v638 = vpop.f32.mrf.mxu0
        %v639 = vadd.f32 %v526, %v638
        %640 = vdwg.mxu0
        %641 = vmax.xlane.f32.xlu0 %v546
        %v642 = vpop.xlane.xlu0 %641
        %643 = vmax.xlane.f32.xlu0 %v549
        %v644 = vpop.xlane.xlu0 %643
        %645 = vmax.xlane.f32.xlu0 %v552
        %v646 = vpop.xlane.xlu0 %645
        %647 = vmax.xlane.f32.xlu0 %v555
        %v648 = vpop.xlane.xlu0 %647
        %649 = vmax.xlane.f32.xlu0 %v558
        %v650 = vpop.xlane.xlu0 %649
        %651 = vmax.xlane.f32.xlu0 %v561
        %v652 = vpop.xlane.xlu0 %651
        %653 = vmax.xlane.f32.xlu0 %v564
        %v654 = vpop.xlane.xlu0 %653
        %655 = vmax.xlane.f32.xlu0 %v567
        %v656 = vpop.xlane.xlu0 %655
        %657 = vmax.xlane.f32.xlu0 %v570
        %v658 = vpop.xlane.xlu0 %657
        %659 = vmax.xlane.f32.xlu0 %v573
        %v660 = vpop.xlane.xlu0 %659
        %661 = vmax.xlane.f32.xlu0 %v576
        %v662 = vpop.xlane.xlu0 %661
        %663 = vmax.xlane.f32.xlu0 %v579
        %v664 = vpop.xlane.xlu0 %663
        %665 = vmax.xlane.f32.xlu0 %v582
        %v666 = vpop.xlane.xlu0 %665
        %667 = vmax.xlane.f32.xlu0 %v585
        %v668 = vpop.xlane.xlu0 %667
        %669 = vmax.xlane.f32.xlu0 %v588
        %v670 = vpop.xlane.xlu0 %669
        %671 = vmax.xlane.f32.xlu0 %v591
        %v672 = vpop.xlane.xlu0 %671
        %673 = vmax.xlane.f32.xlu0 %v594
        %v674 = vpop.xlane.xlu0 %673
        %675 = vmax.xlane.f32.xlu0 %v597
        %v676 = vpop.xlane.xlu0 %675
        %677 = vmax.xlane.f32.xlu0 %v600
        %v678 = vpop.xlane.xlu0 %677
        %679 = vmax.xlane.f32.xlu0 %v603
        %v680 = vpop.xlane.xlu0 %679
        %681 = vmax.xlane.f32.xlu0 %v606
        %v682 = vpop.xlane.xlu0 %681
        %683 = vmax.xlane.f32.xlu0 %v609
        %v684 = vpop.xlane.xlu0 %683
        %685 = vmax.xlane.f32.xlu0 %v612
        %v686 = vpop.xlane.xlu0 %685
        %687 = vmax.xlane.f32.xlu0 %v615
        %v688 = vpop.xlane.xlu0 %687
        %689 = vmax.xlane.f32.xlu0 %v618
        %v690 = vpop.xlane.xlu0 %689
        %691 = vmax.xlane.f32.xlu0 %v621
        %v692 = vpop.xlane.xlu0 %691
        %693 = vmax.xlane.f32.xlu0 %v624
        %v694 = vpop.xlane.xlu0 %693
        %695 = vmax.xlane.f32.xlu0 %v627
        %v696 = vpop.xlane.xlu0 %695
        %697 = vmax.xlane.f32.xlu0 %v630
        %v698 = vpop.xlane.xlu0 %697
        %699 = vmax.xlane.f32.xlu0 %v633
        %v700 = vpop.xlane.xlu0 %699
        %701 = vmax.xlane.f32.xlu0 %v636
        %v702 = vpop.xlane.xlu0 %701
        %703 = vmax.xlane.f32.xlu0 %v639
        %v704 = vpop.xlane.xlu0 %703
        %v705 = vsub.f32 %v546, %v642
        %v706 = vsub.f32 %v549, %v644
        %v707 = vsub.f32 %v552, %v646
        %v708 = vsub.f32 %v555, %v648
        %v709 = vsub.f32 %v558, %v650
        %v710 = vsub.f32 %v561, %v652
        %v711 = vsub.f32 %v564, %v654
        %v712 = vsub.f32 %v567, %v656
        %v713 = vsub.f32 %v570, %v658
        %v714 = vsub.f32 %v573, %v660
        %v715 = vsub.f32 %v576, %v662
        %v716 = vsub.f32 %v579, %v664
        %v717 = vsub.f32 %v582, %v666
        %v718 = vsub.f32 %v585, %v668
        %v719 = vsub.f32 %v588, %v670
        %v720 = vsub.f32 %v591, %v672
        %v721 = vsub.f32 %v594, %v674
        %v722 = vsub.f32 %v597, %v676
        %v723 = vsub.f32 %v600, %v678
        %v724 = vsub.f32 %v603, %v680
        %v725 = vsub.f32 %v606, %v682
        %v726 = vsub.f32 %v609, %v684
        %v727 = vsub.f32 %v612, %v686
        %v728 = vsub.f32 %v615, %v688
        %v729 = vsub.f32 %v618, %v690
        %v730 = vsub.f32 %v621, %v692
        %v731 = vsub.f32 %v624, %v694
        %v732 = vsub.f32 %v627, %v696
        %v733 = vsub.f32 %v630, %v698
        %v734 = vsub.f32 %v633, %v700
        %v735 = vsub.f32 %v636, %v702
        %v736 = vsub.f32 %v639, %v704
        %v737 = vmul.f32 %v705, 1.442695
        %v738 = vpow.pop %v737
        %v739 = vmul.f32 %v706, 1.442695
        %v740 = vpow.pop %v739
        %v741 = vmul.f32 %v707, 1.442695
        %v742 = vpow.pop %v741
        %v743 = vmul.f32 %v708, 1.442695
        %v744 = vpow.pop %v743
        %v745 = vmul.f32 %v709, 1.442695
        %v746 = vpow.pop %v745
        %v747 = vmul.f32 %v710, 1.442695
        %v748 = vpow.pop %v747
        %v749 = vmul.f32 %v711, 1.442695
        %v750 = vpow.pop %v749
        %v751 = vmul.f32 %v712, 1.442695
        %v752 = vpow.pop %v751
        %v753 = vmul.f32 %v713, 1.442695
        %v754 = vpow.pop %v753
        %v755 = vmul.f32 %v714, 1.442695
        %v756 = vpow.pop %v755
        %v757 = vmul.f32 %v715, 1.442695
        %v758 = vpow.pop %v757
        %v759 = vmul.f32 %v716, 1.442695
        %v760 = vpow.pop %v759
        %v761 = vmul.f32 %v717, 1.442695
        %v762 = vpow.pop %v761
        %v763 = vmul.f32 %v718, 1.442695
        %v764 = vpow.pop %v763
        %v765 = vmul.f32 %v719, 1.442695
        %v766 = vpow.pop %v765
        %v767 = vmul.f32 %v720, 1.442695
        %v768 = vpow.pop %v767
        %v769 = vmul.f32 %v721, 1.442695
        %v770 = vpow.pop %v769
        %v771 = vmul.f32 %v722, 1.442695
        %v772 = vpow.pop %v771
        %v773 = vmul.f32 %v723, 1.442695
        %v774 = vpow.pop %v773
        %v775 = vmul.f32 %v724, 1.442695
        %v776 = vpow.pop %v775
        %v777 = vmul.f32 %v725, 1.442695
        %v778 = vpow.pop %v777
        %v779 = vmul.f32 %v726, 1.442695
        %v780 = vpow.pop %v779
        %v781 = vmul.f32 %v727, 1.442695
        %v782 = vpow.pop %v781
        %v783 = vmul.f32 %v728, 1.442695
        %v784 = vpow.pop %v783
        %v785 = vmul.f32 %v729, 1.442695
        %v786 = vpow.pop %v785
        %v787 = vmul.f32 %v730, 1.442695
        %v788 = vpow.pop %v787
        %v789 = vmul.f32 %v731, 1.442695
        %v790 = vpow.pop %v789
        %v791 = vmul.f32 %v732, 1.442695
        %v792 = vpow.pop %v791
        %v793 = vmul.f32 %v733, 1.442695
        %v794 = vpow.pop %v793
        %v795 = vmul.f32 %v734, 1.442695
        %v796 = vpow.pop %v795
        %v797 = vmul.f32 %v735, 1.442695
        %v798 = vpow.pop %v797
        %v799 = vmul.f32 %v736, 1.442695
        %v800 = vpow.pop %v799
        %801 = vadd.xlane.f32.xlu0 %v738
        %v802 = vpop.xlane.xlu0 %801
        %803 = vadd.xlane.f32.xlu0 %v740
        %v804 = vpop.xlane.xlu0 %803
        %805 = vadd.xlane.f32.xlu0 %v742
        %v806 = vpop.xlane.xlu0 %805
        %807 = vadd.xlane.f32.xlu0 %v744
        %v808 = vpop.xlane.xlu0 %807
        %809 = vadd.xlane.f32.xlu0 %v746
        %v810 = vpop.xlane.xlu0 %809
        %811 = vadd.xlane.f32.xlu0 %v748
        %v812 = vpop.xlane.xlu0 %811
        %813 = vadd.xlane.f32.xlu0 %v750
        %v814 = vpop.xlane.xlu0 %813
        %815 = vadd.xlane.f32.xlu0 %v752
        %v816 = vpop.xlane.xlu0 %815
        %817 = vadd.xlane.f32.xlu0 %v754
        %v818 = vpop.xlane.xlu0 %817
        %819 = vadd.xlane.f32.xlu0 %v756
        %v820 = vpop.xlane.xlu0 %819
        %821 = vadd.xlane.f32.xlu0 %v758
        %v822 = vpop.xlane.xlu0 %821
        %823 = vadd.xlane.f32.xlu0 %v760
        %v824 = vpop.xlane.xlu0 %823
        %825 = vadd.xlane.f32.xlu0 %v762
        %v826 = vpop.xlane.xlu0 %825
        %827 = vadd.xlane.f32.xlu0 %v764
        %v828 = vpop.xlane.xlu0 %827
        %829 = vadd.xlane.f32.xlu0 %v766
        %v830 = vpop.xlane.xlu0 %829
        %831 = vadd.xlane.f32.xlu0 %v768
        %v832 = vpop.xlane.xlu0 %831
        %833 = vadd.xlane.f32.xlu0 %v770
        %v834 = vpop.xlane.xlu0 %833
        %835 = vadd.xlane.f32.xlu0 %v772
        %v836 = vpop.xlane.xlu0 %835
        %837 = vadd.xlane.f32.xlu0 %v774
        %v838 = vpop.xlane.xlu0 %837
        %839 = vadd.xlane.f32.xlu0 %v776
        %v840 = vpop.xlane.xlu0 %839
        %841 = vadd.xlane.f32.xlu0 %v778
        %v842 = vpop.xlane.xlu0 %841
        %843 = vadd.xlane.f32.xlu0 %v780
        %v844 = vpop.xlane.xlu0 %843
        %845 = vadd.xlane.f32.xlu0 %v782
        %v846 = vpop.xlane.xlu0 %845
        %847 = vadd.xlane.f32.xlu0 %v784
        %v848 = vpop.xlane.xlu0 %847
        %849 = vadd.xlane.f32.xlu0 %v786
        %v850 = vpop.xlane.xlu0 %849
        %851 = vadd.xlane.f32.xlu0 %v788
        %v852 = vpop.xlane.xlu0 %851
        %853 = vadd.xlane.f32.xlu0 %v790
        %v854 = vpop.xlane.xlu0 %853
        %855 = vadd.xlane.f32.xlu0 %v792
        %v856 = vpop.xlane.xlu0 %855
        %857 = vadd.xlane.f32.xlu0 %v794
        %v858 = vpop.xlane.xlu0 %857
        %859 = vadd.xlane.f32.xlu0 %v796
        %v860 = vpop.xlane.xlu0 %859
        %861 = vadd.xlane.f32.xlu0 %v798
        %v862 = vpop.xlane.xlu0 %861
        %863 = vadd.xlane.f32.xlu0 %v800
        %v864 = vpop.xlane.xlu0 %863
        %v865 = vrcp.pop %v802
        %v866 = vmul.f32 %v802, %v865
        %v867 = vsub.f32 1.0, %v866
        %v868 = vmul.f32 %v865, %v867
        %v869 = vadd.f32 %v865, %v868
        %vm870 = vweird.f32 %v802
        %vm871 = vweird.f32 %v865
        %vm872 = vmor %vm870, %vm871
        %v873 = vsel %vm872, %v865, %v869
        %v874 = vand.u32 2147483647, %v802
        %vm875 = vcmp.eq.f32.partialorder %v874, 8.507059e+37
        %v876 = vand.u32 %v802, 2147483648
        %v877 = vor.u32 1.1754944e-38, %v876
        %v878 = vsel %vm875, %v877, %v873
        %v879 = vmul.f32 %v738, %v878
        %v880 = vrcp.pop %v804
        %v881 = vmul.f32 %v804, %v880
        %v882 = vsub.f32 1.0, %v881
        %v883 = vmul.f32 %v880, %v882
        %v884 = vadd.f32 %v880, %v883
        %vm885 = vweird.f32 %v804
        %vm886 = vweird.f32 %v880
        %vm887 = vmor %vm885, %vm886
        %v888 = vsel %vm887, %v880, %v884
        %v889 = vand.u32 2147483647, %v804
        %vm890 = vcmp.eq.f32.partialorder %v889, 8.507059e+37
        %v891 = vand.u32 %v804, 2147483648
        %v892 = vor.u32 1.1754944e-38, %v891
        %v893 = vsel %vm890, %v892, %v888
        %v894 = vmul.f32 %v740, %v893
        %v895 = vrcp.pop %v806
        %v896 = vmul.f32 %v806, %v895
        %v897 = vsub.f32 1.0, %v896
        %v898 = vmul.f32 %v895, %v897
        %v899 = vadd.f32 %v895, %v898
        %vm900 = vweird.f32 %v806
        %vm901 = vweird.f32 %v895
        %vm902 = vmor %vm900, %vm901
        %v903 = vsel %vm902, %v895, %v899
        %v904 = vand.u32 2147483647, %v806
        %vm905 = vcmp.eq.f32.partialorder %v904, 8.507059e+37
        %v906 = vand.u32 %v806, 2147483648
        %v907 = vor.u32 1.1754944e-38, %v906
        %v908 = vsel %vm905, %v907, %v903
        %v909 = vmul.f32 %v742, %v908
        %v910 = vrcp.pop %v808
        %v911 = vmul.f32 %v808, %v910
        %v912 = vsub.f32 1.0, %v911
        %v913 = vmul.f32 %v910, %v912
        %v914 = vadd.f32 %v910, %v913
        %vm915 = vweird.f32 %v808
        %vm916 = vweird.f32 %v910
        %vm917 = vmor %vm915, %vm916
        %v918 = vsel %vm917, %v910, %v914
        %v919 = vand.u32 2147483647, %v808
        %vm920 = vcmp.eq.f32.partialorder %v919, 8.507059e+37
        %v921 = vand.u32 %v808, 2147483648
        %v922 = vor.u32 1.1754944e-38, %v921
        %v923 = vsel %vm920, %v922, %v918
        %v924 = vmul.f32 %v744, %v923
        %v925 = vrcp.pop %v810
        %v926 = vmul.f32 %v810, %v925
        %v927 = vsub.f32 1.0, %v926
        %v928 = vmul.f32 %v925, %v927
        %v929 = vadd.f32 %v925, %v928
        %vm930 = vweird.f32 %v810
        %vm931 = vweird.f32 %v925
        %vm932 = vmor %vm930, %vm931
        %v933 = vsel %vm932, %v925, %v929
        %v934 = vand.u32 2147483647, %v810
        %vm935 = vcmp.eq.f32.partialorder %v934, 8.507059e+37
        %v936 = vand.u32 %v810, 2147483648
        %v937 = vor.u32 1.1754944e-38, %v936
        %v938 = vsel %vm935, %v937, %v933
        %v939 = vmul.f32 %v746, %v938
        %v940 = vrcp.pop %v812
        %v941 = vmul.f32 %v812, %v940
        %v942 = vsub.f32 1.0, %v941
        %v943 = vmul.f32 %v940, %v942
        %v944 = vadd.f32 %v940, %v943
        %vm945 = vweird.f32 %v812
        %vm946 = vweird.f32 %v940
        %vm947 = vmor %vm945, %vm946
        %v948 = vsel %vm947, %v940, %v944
        %v949 = vand.u32 2147483647, %v812
        %vm950 = vcmp.eq.f32.partialorder %v949, 8.507059e+37
        %v951 = vand.u32 %v812, 2147483648
        %v952 = vor.u32 1.1754944e-38, %v951
        %v953 = vsel %vm950, %v952, %v948
        %v954 = vmul.f32 %v748, %v953
        %v955 = vrcp.pop %v814
        %v956 = vmul.f32 %v814, %v955
        %v957 = vsub.f32 1.0, %v956
        %v958 = vmul.f32 %v955, %v957
        %v959 = vadd.f32 %v955, %v958
        %vm960 = vweird.f32 %v814
        %vm961 = vweird.f32 %v955
        %vm962 = vmor %vm960, %vm961
        %v963 = vsel %vm962, %v955, %v959
        %v964 = vand.u32 2147483647, %v814
        %vm965 = vcmp.eq.f32.partialorder %v964, 8.507059e+37
        %v966 = vand.u32 %v814, 2147483648
        %v967 = vor.u32 1.1754944e-38, %v966
        %v968 = vsel %vm965, %v967, %v963
        %v969 = vmul.f32 %v750, %v968
        %v970 = vrcp.pop %v816
        %v971 = vmul.f32 %v816, %v970
        %v972 = vsub.f32 1.0, %v971
        %v973 = vmul.f32 %v970, %v972
        %v974 = vadd.f32 %v970, %v973
        %vm975 = vweird.f32 %v816
        %vm976 = vweird.f32 %v970
        %vm977 = vmor %vm975, %vm976
        %v978 = vsel %vm977, %v970, %v974
        %v979 = vand.u32 2147483647, %v816
        %vm980 = vcmp.eq.f32.partialorder %v979, 8.507059e+37
        %v981 = vand.u32 %v816, 2147483648
        %v982 = vor.u32 1.1754944e-38, %v981
        %v983 = vsel %vm980, %v982, %v978
        %v984 = vmul.f32 %v752, %v983
        %v985 = vrcp.pop %v818
        %v986 = vmul.f32 %v818, %v985
        %v987 = vsub.f32 1.0, %v986
        %v988 = vmul.f32 %v985, %v987
        %v989 = vadd.f32 %v985, %v988
        %vm990 = vweird.f32 %v818
        %vm991 = vweird.f32 %v985
        %vm992 = vmor %vm990, %vm991
        %v993 = vsel %vm992, %v985, %v989
        %v994 = vand.u32 2147483647, %v818
        %vm995 = vcmp.eq.f32.partialorder %v994, 8.507059e+37
        %v996 = vand.u32 %v818, 2147483648
        %v997 = vor.u32 1.1754944e-38, %v996
        %v998 = vsel %vm995, %v997, %v993
        %v999 = vmul.f32 %v754, %v998
        %v1000 = vrcp.pop %v820
        %v1001 = vmul.f32 %v820, %v1000
        %v1002 = vsub.f32 1.0, %v1001
        %v1003 = vmul.f32 %v1000, %v1002
        %v1004 = vadd.f32 %v1000, %v1003
        %vm1005 = vweird.f32 %v820
        %vm1006 = vweird.f32 %v1000
        %vm1007 = vmor %vm1005, %vm1006
        %v1008 = vsel %vm1007, %v1000, %v1004
        %v1009 = vand.u32 2147483647, %v820
        %vm1010 = vcmp.eq.f32.partialorder %v1009, 8.507059e+37
        %v1011 = vand.u32 %v820, 2147483648
        %v1012 = vor.u32 1.1754944e-38, %v1011
        %v1013 = vsel %vm1010, %v1012, %v1008
        %v1014 = vmul.f32 %v756, %v1013
        %v1015 = vrcp.pop %v822
        %v1016 = vmul.f32 %v822, %v1015
        %v1017 = vsub.f32 1.0, %v1016
        %v1018 = vmul.f32 %v1015, %v1017
        %v1019 = vadd.f32 %v1015, %v1018
        %vm1020 = vweird.f32 %v822
        %vm1021 = vweird.f32 %v1015
        %vm1022 = vmor %vm1020, %vm1021
        %v1023 = vsel %vm1022, %v1015, %v1019
        %v1024 = vand.u32 2147483647, %v822
        %vm1025 = vcmp.eq.f32.partialorder %v1024, 8.507059e+37
        %v1026 = vand.u32 %v822, 2147483648
        %v1027 = vor.u32 1.1754944e-38, %v1026
        %v1028 = vsel %vm1025, %v1027, %v1023
        %v1029 = vmul.f32 %v758, %v1028
        %v1030 = vrcp.pop %v824
        %v1031 = vmul.f32 %v824, %v1030
        %v1032 = vsub.f32 1.0, %v1031
        %v1033 = vmul.f32 %v1030, %v1032
        %v1034 = vadd.f32 %v1030, %v1033
        %vm1035 = vweird.f32 %v824
        %vm1036 = vweird.f32 %v1030
        %vm1037 = vmor %vm1035, %vm1036
        %v1038 = vsel %vm1037, %v1030, %v1034
        %v1039 = vand.u32 2147483647, %v824
        %vm1040 = vcmp.eq.f32.partialorder %v1039, 8.507059e+37
        %v1041 = vand.u32 %v824, 2147483648
        %v1042 = vor.u32 1.1754944e-38, %v1041
        %v1043 = vsel %vm1040, %v1042, %v1038
        %v1044 = vmul.f32 %v760, %v1043
        %v1045 = vrcp.pop %v826
        %v1046 = vmul.f32 %v826, %v1045
        %v1047 = vsub.f32 1.0, %v1046
        %v1048 = vmul.f32 %v1045, %v1047
        %v1049 = vadd.f32 %v1045, %v1048
        %vm1050 = vweird.f32 %v826
        %vm1051 = vweird.f32 %v1045
        %vm1052 = vmor %vm1050, %vm1051
        %v1053 = vsel %vm1052, %v1045, %v1049
        %v1054 = vand.u32 2147483647, %v826
        %vm1055 = vcmp.eq.f32.partialorder %v1054, 8.507059e+37
        %v1056 = vand.u32 %v826, 2147483648
        %v1057 = vor.u32 1.1754944e-38, %v1056
        %v1058 = vsel %vm1055, %v1057, %v1053
        %v1059 = vmul.f32 %v762, %v1058
        %v1060 = vrcp.pop %v828
        %v1061 = vmul.f32 %v828, %v1060
        %v1062 = vsub.f32 1.0, %v1061
        %v1063 = vmul.f32 %v1060, %v1062
        %v1064 = vadd.f32 %v1060, %v1063
        %vm1065 = vweird.f32 %v828
        %vm1066 = vweird.f32 %v1060
        %vm1067 = vmor %vm1065, %vm1066
        %v1068 = vsel %vm1067, %v1060, %v1064
        %v1069 = vand.u32 2147483647, %v828
        %vm1070 = vcmp.eq.f32.partialorder %v1069, 8.507059e+37
        %v1071 = vand.u32 %v828, 2147483648
        %v1072 = vor.u32 1.1754944e-38, %v1071
        %v1073 = vsel %vm1070, %v1072, %v1068
        %v1074 = vmul.f32 %v764, %v1073
        %v1075 = vrcp.pop %v830
        %v1076 = vmul.f32 %v830, %v1075
        %v1077 = vsub.f32 1.0, %v1076
        %v1078 = vmul.f32 %v1075, %v1077
        %v1079 = vadd.f32 %v1075, %v1078
        %vm1080 = vweird.f32 %v830
        %vm1081 = vweird.f32 %v1075
        %vm1082 = vmor %vm1080, %vm1081
        %v1083 = vsel %vm1082, %v1075, %v1079
        %v1084 = vand.u32 2147483647, %v830
        %vm1085 = vcmp.eq.f32.partialorder %v1084, 8.507059e+37
        %v1086 = vand.u32 %v830, 2147483648
        %v1087 = vor.u32 1.1754944e-38, %v1086
        %v1088 = vsel %vm1085, %v1087, %v1083
        %v1089 = vmul.f32 %v766, %v1088
        %v1090 = vrcp.pop %v832
        %v1091 = vmul.f32 %v832, %v1090
        %v1092 = vsub.f32 1.0, %v1091
        %v1093 = vmul.f32 %v1090, %v1092
        %v1094 = vadd.f32 %v1090, %v1093
        %vm1095 = vweird.f32 %v832
        %vm1096 = vweird.f32 %v1090
        %vm1097 = vmor %vm1095, %vm1096
        %v1098 = vsel %vm1097, %v1090, %v1094
        %v1099 = vand.u32 2147483647, %v832
        %vm1100 = vcmp.eq.f32.partialorder %v1099, 8.507059e+37
        %v1101 = vand.u32 %v832, 2147483648
        %v1102 = vor.u32 1.1754944e-38, %v1101
        %v1103 = vsel %vm1100, %v1102, %v1098
        %v1104 = vmul.f32 %v768, %v1103
        %v1105 = vrcp.pop %v834
        %v1106 = vmul.f32 %v834, %v1105
        %v1107 = vsub.f32 1.0, %v1106
        %v1108 = vmul.f32 %v1105, %v1107
        %v1109 = vadd.f32 %v1105, %v1108
        %vm1110 = vweird.f32 %v834
        %vm1111 = vweird.f32 %v1105
        %vm1112 = vmor %vm1110, %vm1111
        %v1113 = vsel %vm1112, %v1105, %v1109
        %v1114 = vand.u32 2147483647, %v834
        %vm1115 = vcmp.eq.f32.partialorder %v1114, 8.507059e+37
        %v1116 = vand.u32 %v834, 2147483648
        %v1117 = vor.u32 1.1754944e-38, %v1116
        %v1118 = vsel %vm1115, %v1117, %v1113
        %v1119 = vmul.f32 %v770, %v1118
        %v1120 = vrcp.pop %v836
        %v1121 = vmul.f32 %v836, %v1120
        %v1122 = vsub.f32 1.0, %v1121
        %v1123 = vmul.f32 %v1120, %v1122
        %v1124 = vadd.f32 %v1120, %v1123
        %vm1125 = vweird.f32 %v836
        %vm1126 = vweird.f32 %v1120
        %vm1127 = vmor %vm1125, %vm1126
        %v1128 = vsel %vm1127, %v1120, %v1124
        %v1129 = vand.u32 2147483647, %v836
        %vm1130 = vcmp.eq.f32.partialorder %v1129, 8.507059e+37
        %v1131 = vand.u32 %v836, 2147483648
        %v1132 = vor.u32 1.1754944e-38, %v1131
        %v1133 = vsel %vm1130, %v1132, %v1128
        %v1134 = vmul.f32 %v772, %v1133
        %v1135 = vrcp.pop %v838
        %v1136 = vmul.f32 %v838, %v1135
        %v1137 = vsub.f32 1.0, %v1136
        %v1138 = vmul.f32 %v1135, %v1137
        %v1139 = vadd.f32 %v1135, %v1138
        %vm1140 = vweird.f32 %v838
        %vm1141 = vweird.f32 %v1135
        %vm1142 = vmor %vm1140, %vm1141
        %v1143 = vsel %vm1142, %v1135, %v1139
        %v1144 = vand.u32 2147483647, %v838
        %vm1145 = vcmp.eq.f32.partialorder %v1144, 8.507059e+37
        %v1146 = vand.u32 %v838, 2147483648
        %v1147 = vor.u32 1.1754944e-38, %v1146
        %v1148 = vsel %vm1145, %v1147, %v1143
        %v1149 = vmul.f32 %v774, %v1148
        %v1150 = vrcp.pop %v840
        %v1151 = vmul.f32 %v840, %v1150
        %v1152 = vsub.f32 1.0, %v1151
        %v1153 = vmul.f32 %v1150, %v1152
        %v1154 = vadd.f32 %v1150, %v1153
        %vm1155 = vweird.f32 %v840
        %vm1156 = vweird.f32 %v1150
        %vm1157 = vmor %vm1155, %vm1156
        %v1158 = vsel %vm1157, %v1150, %v1154
        %v1159 = vand.u32 2147483647, %v840
        %vm1160 = vcmp.eq.f32.partialorder %v1159, 8.507059e+37
        %v1161 = vand.u32 %v840, 2147483648
        %v1162 = vor.u32 1.1754944e-38, %v1161
        %v1163 = vsel %vm1160, %v1162, %v1158
        %v1164 = vmul.f32 %v776, %v1163
        %v1165 = vrcp.pop %v842
        %v1166 = vmul.f32 %v842, %v1165
        %v1167 = vsub.f32 1.0, %v1166
        %v1168 = vmul.f32 %v1165, %v1167
        %v1169 = vadd.f32 %v1165, %v1168
        %vm1170 = vweird.f32 %v842
        %vm1171 = vweird.f32 %v1165
        %vm1172 = vmor %vm1170, %vm1171
        %v1173 = vsel %vm1172, %v1165, %v1169
        %v1174 = vand.u32 2147483647, %v842
        %vm1175 = vcmp.eq.f32.partialorder %v1174, 8.507059e+37
        %v1176 = vand.u32 %v842, 2147483648
        %v1177 = vor.u32 1.1754944e-38, %v1176
        %v1178 = vsel %vm1175, %v1177, %v1173
        %v1179 = vmul.f32 %v778, %v1178
        %v1180 = vrcp.pop %v844
        %v1181 = vmul.f32 %v844, %v1180
        %v1182 = vsub.f32 1.0, %v1181
        %v1183 = vmul.f32 %v1180, %v1182
        %v1184 = vadd.f32 %v1180, %v1183
        %vm1185 = vweird.f32 %v844
        %vm1186 = vweird.f32 %v1180
        %vm1187 = vmor %vm1185, %vm1186
        %v1188 = vsel %vm1187, %v1180, %v1184
        %v1189 = vand.u32 2147483647, %v844
        %vm1190 = vcmp.eq.f32.partialorder %v1189, 8.507059e+37
        %v1191 = vand.u32 %v844, 2147483648
        %v1192 = vor.u32 1.1754944e-38, %v1191
        %v1193 = vsel %vm1190, %v1192, %v1188
        %v1194 = vmul.f32 %v780, %v1193
        %v1195 = vrcp.pop %v846
        %v1196 = vmul.f32 %v846, %v1195
        %v1197 = vsub.f32 1.0, %v1196
        %v1198 = vmul.f32 %v1195, %v1197
        %v1199 = vadd.f32 %v1195, %v1198
        %vm1200 = vweird.f32 %v846
        %vm1201 = vweird.f32 %v1195
        %vm1202 = vmor %vm1200, %vm1201
        %v1203 = vsel %vm1202, %v1195, %v1199
        %v1204 = vand.u32 2147483647, %v846
        %vm1205 = vcmp.eq.f32.partialorder %v1204, 8.507059e+37
        %v1206 = vand.u32 %v846, 2147483648
        %v1207 = vor.u32 1.1754944e-38, %v1206
        %v1208 = vsel %vm1205, %v1207, %v1203
        %v1209 = vmul.f32 %v782, %v1208
        %v1210 = vrcp.pop %v848
        %v1211 = vmul.f32 %v848, %v1210
        %v1212 = vsub.f32 1.0, %v1211
        %v1213 = vmul.f32 %v1210, %v1212
        %v1214 = vadd.f32 %v1210, %v1213
        %vm1215 = vweird.f32 %v848
        %vm1216 = vweird.f32 %v1210
        %vm1217 = vmor %vm1215, %vm1216
        %v1218 = vsel %vm1217, %v1210, %v1214
        %v1219 = vand.u32 2147483647, %v848
        %vm1220 = vcmp.eq.f32.partialorder %v1219, 8.507059e+37
        %v1221 = vand.u32 %v848, 2147483648
        %v1222 = vor.u32 1.1754944e-38, %v1221
        %v1223 = vsel %vm1220, %v1222, %v1218
        %v1224 = vmul.f32 %v784, %v1223
        %v1225 = vrcp.pop %v850
        %v1226 = vmul.f32 %v850, %v1225
        %v1227 = vsub.f32 1.0, %v1226
        %v1228 = vmul.f32 %v1225, %v1227
        %v1229 = vadd.f32 %v1225, %v1228
        %vm1230 = vweird.f32 %v850
        %vm1231 = vweird.f32 %v1225
        %vm1232 = vmor %vm1230, %vm1231
        %v1233 = vsel %vm1232, %v1225, %v1229
        %v1234 = vand.u32 2147483647, %v850
        %vm1235 = vcmp.eq.f32.partialorder %v1234, 8.507059e+37
        %v1236 = vand.u32 %v850, 2147483648
        %v1237 = vor.u32 1.1754944e-38, %v1236
        %v1238 = vsel %vm1235, %v1237, %v1233
        %v1239 = vmul.f32 %v786, %v1238
        %v1240 = vrcp.pop %v852
        %v1241 = vmul.f32 %v852, %v1240
        %v1242 = vsub.f32 1.0, %v1241
        %v1243 = vmul.f32 %v1240, %v1242
        %v1244 = vadd.f32 %v1240, %v1243
        %vm1245 = vweird.f32 %v852
        %vm1246 = vweird.f32 %v1240
        %vm1247 = vmor %vm1245, %vm1246
        %v1248 = vsel %vm1247, %v1240, %v1244
        %v1249 = vand.u32 2147483647, %v852
        %vm1250 = vcmp.eq.f32.partialorder %v1249, 8.507059e+37
        %v1251 = vand.u32 %v852, 2147483648
        %v1252 = vor.u32 1.1754944e-38, %v1251
        %v1253 = vsel %vm1250, %v1252, %v1248
        %v1254 = vmul.f32 %v788, %v1253
        %v1255 = vrcp.pop %v854
        %v1256 = vmul.f32 %v854, %v1255
        %v1257 = vsub.f32 1.0, %v1256
        %v1258 = vmul.f32 %v1255, %v1257
        %v1259 = vadd.f32 %v1255, %v1258
        %vm1260 = vweird.f32 %v854
        %vm1261 = vweird.f32 %v1255
        %vm1262 = vmor %vm1260, %vm1261
        %v1263 = vsel %vm1262, %v1255, %v1259
        %v1264 = vand.u32 2147483647, %v854
        %vm1265 = vcmp.eq.f32.partialorder %v1264, 8.507059e+37
        %v1266 = vand.u32 %v854, 2147483648
        %v1267 = vor.u32 1.1754944e-38, %v1266
        %v1268 = vsel %vm1265, %v1267, %v1263
        %v1269 = vmul.f32 %v790, %v1268
        %v1270 = vrcp.pop %v856
        %v1271 = vmul.f32 %v856, %v1270
        %v1272 = vsub.f32 1.0, %v1271
        %v1273 = vmul.f32 %v1270, %v1272
        %v1274 = vadd.f32 %v1270, %v1273
        %vm1275 = vweird.f32 %v856
        %vm1276 = vweird.f32 %v1270
        %vm1277 = vmor %vm1275, %vm1276
        %v1278 = vsel %vm1277, %v1270, %v1274
        %v1279 = vand.u32 2147483647, %v856
        %vm1280 = vcmp.eq.f32.partialorder %v1279, 8.507059e+37
        %v1281 = vand.u32 %v856, 2147483648
        %v1282 = vor.u32 1.1754944e-38, %v1281
        %v1283 = vsel %vm1280, %v1282, %v1278
        %v1284 = vmul.f32 %v792, %v1283
        %v1285 = vrcp.pop %v858
        %v1286 = vmul.f32 %v858, %v1285
        %v1287 = vsub.f32 1.0, %v1286
        %v1288 = vmul.f32 %v1285, %v1287
        %v1289 = vadd.f32 %v1285, %v1288
        %vm1290 = vweird.f32 %v858
        %vm1291 = vweird.f32 %v1285
        %vm1292 = vmor %vm1290, %vm1291
        %v1293 = vsel %vm1292, %v1285, %v1289
        %v1294 = vand.u32 2147483647, %v858
        %vm1295 = vcmp.eq.f32.partialorder %v1294, 8.507059e+37
        %v1296 = vand.u32 %v858, 2147483648
        %v1297 = vor.u32 1.1754944e-38, %v1296
        %v1298 = vsel %vm1295, %v1297, %v1293
        %v1299 = vmul.f32 %v794, %v1298
        %v1300 = vrcp.pop %v860
        %v1301 = vmul.f32 %v860, %v1300
        %v1302 = vsub.f32 1.0, %v1301
        %v1303 = vmul.f32 %v1300, %v1302
        %v1304 = vadd.f32 %v1300, %v1303
        %vm1305 = vweird.f32 %v860
        %vm1306 = vweird.f32 %v1300
        %vm1307 = vmor %vm1305, %vm1306
        %v1308 = vsel %vm1307, %v1300, %v1304
        %v1309 = vand.u32 2147483647, %v860
        %vm1310 = vcmp.eq.f32.partialorder %v1309, 8.507059e+37
        %v1311 = vand.u32 %v860, 2147483648
        %v1312 = vor.u32 1.1754944e-38, %v1311
        %v1313 = vsel %vm1310, %v1312, %v1308
        %v1314 = vmul.f32 %v796, %v1313
        %v1315 = vrcp.pop %v862
        %v1316 = vmul.f32 %v862, %v1315
        %v1317 = vsub.f32 1.0, %v1316
        %v1318 = vmul.f32 %v1315, %v1317
        %v1319 = vadd.f32 %v1315, %v1318
        %vm1320 = vweird.f32 %v862
        %vm1321 = vweird.f32 %v1315
        %vm1322 = vmor %vm1320, %vm1321
        %v1323 = vsel %vm1322, %v1315, %v1319
        %v1324 = vand.u32 2147483647, %v862
        %vm1325 = vcmp.eq.f32.partialorder %v1324, 8.507059e+37
        %v1326 = vand.u32 %v862, 2147483648
        %v1327 = vor.u32 1.1754944e-38, %v1326
        %v1328 = vsel %vm1325, %v1327, %v1323
        %v1329 = vmul.f32 %v798, %v1328
        %v1330 = vrcp.pop %v864
        %v1331 = vmul.f32 %v864, %v1330
        %v1332 = vsub.f32 1.0, %v1331
        %v1333 = vmul.f32 %v1330, %v1332
        %v1334 = vadd.f32 %v1330, %v1333
        %vm1335 = vweird.f32 %v864
        %vm1336 = vweird.f32 %v1330
        %vm1337 = vmor %vm1335, %vm1336
        %v1338 = vsel %vm1337, %v1330, %v1334
        %v1339 = vand.u32 2147483647, %v864
        %vm1340 = vcmp.eq.f32.partialorder %v1339, 8.507059e+37
        %v1341 = vand.u32 %v864, 2147483648
        %v1342 = vor.u32 1.1754944e-38, %v1341
        %v1343 = vsel %vm1340, %v1342, %v1338
        %v1344 = vmul.f32 %v800, %v1343
        %1345 = vrot.lane.b32.xlu0 %v894, 4
        %v1346 = vpop.permute.xlu0 %1345
        %v1347 = vadd.f32 %v879, %v1346
        %1348 = vrot.lane.b32.xlu0 %v909, 8
        %v1349 = vpop.permute.xlu0 %1348
        %v1350 = vadd.f32 %v1347, %v1349
        %1351 = vrot.lane.b32.xlu0 %v924, 12
        %v1352 = vpop.permute.xlu0 %1351
        %v1353 = vadd.f32 %v1350, %v1352
        %1354 = vrot.lane.b32.xlu0 %v939, 16
        %v1355 = vpop.permute.xlu0 %1354
        %v1356 = vadd.f32 %v1353, %v1355
        %1357 = vrot.lane.b32.xlu0 %v954, 20
        %v1358 = vpop.permute.xlu0 %1357
        %v1359 = vadd.f32 %v1356, %v1358
        %1360 = vrot.lane.b32.xlu0 %v969, 24
        %v1361 = vpop.permute.xlu0 %1360
        %v1362 = vadd.f32 %v1359, %v1361
        %1363 = vrot.lane.b32.xlu0 %v984, 28
        %v1364 = vpop.permute.xlu0 %1363
        %v1365 = vadd.f32 %v1362, %v1364
        %1366 = vrot.lane.b32.xlu0 %v999, 32
        %v1367 = vpop.permute.xlu0 %1366
        %v1368 = vadd.f32 %v1365, %v1367
        %1369 = vrot.lane.b32.xlu0 %v1014, 36
        %v1370 = vpop.permute.xlu0 %1369
        %v1371 = vadd.f32 %v1368, %v1370
        %1372 = vrot.lane.b32.xlu0 %v1029, 40
        %v1373 = vpop.permute.xlu0 %1372
        %v1374 = vadd.f32 %v1371, %v1373
        %1375 = vrot.lane.b32.xlu0 %v1044, 44
        %v1376 = vpop.permute.xlu0 %1375
        %v1377 = vadd.f32 %v1374, %v1376
        %1378 = vrot.lane.b32.xlu0 %v1059, 48
        %v1379 = vpop.permute.xlu0 %1378
        %v1380 = vadd.f32 %v1377, %v1379
        %1381 = vrot.lane.b32.xlu0 %v1074, 52
        %v1382 = vpop.permute.xlu0 %1381
        %v1383 = vadd.f32 %v1380, %v1382
        %1384 = vrot.lane.b32.xlu0 %v1089, 56
        %v1385 = vpop.permute.xlu0 %1384
        %v1386 = vadd.f32 %v1383, %v1385
        %1387 = vrot.lane.b32.xlu0 %v1104, 60
        %v1388 = vpop.permute.xlu0 %1387
        %v1389 = vadd.f32 %v1386, %v1388
        %1390 = vrot.lane.b32.xlu0 %v1119, 64
        %v1391 = vpop.permute.xlu0 %1390
        %v1392 = vadd.f32 %v1389, %v1391
        %1393 = vrot.lane.b32.xlu0 %v1134, 68
        %v1394 = vpop.permute.xlu0 %1393
        %v1395 = vadd.f32 %v1392, %v1394
        %1396 = vrot.lane.b32.xlu0 %v1149, 72
        %v1397 = vpop.permute.xlu0 %1396
        %v1398 = vadd.f32 %v1395, %v1397
        %1399 = vrot.lane.b32.xlu0 %v1164, 76
        %v1400 = vpop.permute.xlu0 %1399
        %v1401 = vadd.f32 %v1398, %v1400
        %1402 = vrot.lane.b32.xlu0 %v1179, 80
        %v1403 = vpop.permute.xlu0 %1402
        %v1404 = vadd.f32 %v1401, %v1403
        %1405 = vrot.lane.b32.xlu0 %v1194, 84
        %v1406 = vpop.permute.xlu0 %1405
        %v1407 = vadd.f32 %v1404, %v1406
        %1408 = vrot.lane.b32.xlu0 %v1209, 88
        %v1409 = vpop.permute.xlu0 %1408
        %v1410 = vadd.f32 %v1407, %v1409
        %1411 = vrot.lane.b32.xlu0 %v1224, 92
        %v1412 = vpop.permute.xlu0 %1411
        %v1413 = vadd.f32 %v1410, %v1412
        %1414 = vrot.lane.b32.xlu0 %v1239, 96
        %v1415 = vpop.permute.xlu0 %1414
        %v1416 = vadd.f32 %v1413, %v1415
        %1417 = vrot.lane.b32.xlu0 %v1254, 100
        %v1418 = vpop.permute.xlu0 %1417
        %v1419 = vadd.f32 %v1416, %v1418
        %1420 = vrot.lane.b32.xlu0 %v1269, 104
        %v1421 = vpop.permute.xlu0 %1420
        %v1422 = vadd.f32 %v1419, %v1421
        %1423 = vrot.lane.b32.xlu0 %v1284, 108
        %v1424 = vpop.permute.xlu0 %1423
        %v1425 = vadd.f32 %v1422, %v1424
        %1426 = vrot.lane.b32.xlu0 %v1299, 112
        %v1427 = vpop.permute.xlu0 %1426
        %v1428 = vadd.f32 %v1425, %v1427
        %1429 = vrot.lane.b32.xlu0 %v1314, 116
        %v1430 = vpop.permute.xlu0 %1429
        %v1431 = vadd.f32 %v1428, %v1430
        %1432 = vrot.lane.b32.xlu0 %v1329, 120
        %v1433 = vpop.permute.xlu0 %1432
        %v1434 = vadd.f32 %v1431, %v1433
        %1435 = vrot.lane.b32.xlu0 %v1344, 124
        %v1436 = vpop.permute.xlu0 %1435
        %v1437 = vadd.f32 %v1434, %v1436
        %1438 = vst [vmem:[%s218] sm:$0xff] %v1437
        %s1439 = sand.u32 %s137, 1
        %s1440 = scalar_lea.sflag [#allocation3], %s1439
        %s1441 = sand.u32 %s137, 1
        %s1442 = smul.addr %s1441, 8
        %s1443 = scalar_lea.vmem [#allocation2], %s1442
        // Predicated region
        $region41: #{tpu_custom_call.1} parent=39 // pred_check
          %p1444 = pneg %p147
        $region42: #{tpu_custom_call.1} parent=39 // pred_check_branch
          %1446 = sbr.rel (%p1444) target = $region44
        $region43: #{tpu_custom_call.1} parent=39 // pred_region
          %1448 = vsyncadd %s1440, 0
          %s1449 = smul.addr %s19, 8
          %s1450 = scalar_lea.hbm %s5, %s1449
          %s1452 = sshll.u32 %s1443, 4
          %s1453 = int_to_ptr.vmem [resolvable:$true] %s1452
          %s1454 = sshll.u32 %s1450, 4
          %s1455 = int_to_ptr.hbm [resolvable:$true] %s1454
          %1457 = dma.vmem_to_hbm [thread:$0]  %s1453, 128, %s1455, %s1440
        $region44: #{tpu_custom_call.1} parent=39 // pred_fallthru
          _
      $region40: #{tpu_custom_call.1} parent=5 // pred_fallthru
        _
      %p1458 = scmp.le.s32.totalorder 2, %s14
      // Predicated region
      $region45: #{tpu_custom_call.1} parent=5 // pred_check
        %p1459 = pneg %p1458
      $region46: #{tpu_custom_call.1} parent=5 // pred_check_branch
        %1461 = sbr.rel (%p1459) target = $region48
      $region47: #{tpu_custom_call.1} parent=5 // pred_region
        %s1462 = ssub.s32 %s14, 2
        // Predicated region
        $region49: #{tpu_custom_call.1} parent=47 // pred_check
          %p1463 = pneg %p153
        $region50: #{tpu_custom_call.1} parent=47 // pred_check_branch
          %1465 = sbr.rel (%p1463) target = $region52
        $region51: #{tpu_custom_call.1} parent=47 // pred_region
          %s1466 = sand.u32 %s138, 1
          %s1467 = scalar_lea.sflag [#allocation3], %s1466
          %s1468 = sand.u32 %s138, 1
          %s1469 = smul.addr %s1468, 8
          %s1470 = scalar_lea.vmem [#allocation2], %s1469
          %1472 = dma.done %s1467, 128
        $region52: #{tpu_custom_call.1} parent=47 // pred_fallthru
          _
      $region48: #{tpu_custom_call.1} parent=5 // pred_fallthru
        _
    $region6: #{tpu_custom_call.1} parent=1 // loop_footer
      %s18 = sadd.s32 1, %s14
    $region7: #{tpu_custom_call.1} parent=1 // loop_footer_branch
      %13 = sbr.rel target = $region3
    $region8: #{tpu_custom_call.1} parent=1 // loop_exit
      _
    %1473 = vsyncpa [#allocation3], 1
    %s1474 = scalar_lea.sflag [#allocation3], 1
    %1475 = vsyncpa %s1474, 1

</llo_original>
